<compile_context>
chip_gen: v5e
topology: v5e:2x2
jax: 0.10.0
libtpu: 0.0.40
codegen_flags: <defaults>
</compile_context>

<pallas_src>
import functools

import jax
import jax.numpy as jnp
from jax.experimental import pallas as pl
from jax.experimental.pallas import tpu as pltpu


IN_DIM = 32
HID_DIM = 150
OUT_DIM = 1434
TILE_N_MAX = 1024       # rows per grid step for large N (safe on v5e/v6e/v7x)


def _cdiv(a, b):
    return -(-a // b)


def _round_up(x, m):
    return _cdiv(x, m) * m


def _choose_tiling(n):
    """Pick (tile_n, grid_steps).

    Goals: tile_n multiple of 8 (sublane), tile_n <= TILE_N_MAX, at least 2
    grid steps when n > 8 (so v7x can shard the 'parallel' axis across its two
    TensorCores), and zero / near-zero wasted rows.  Prefers an exact-divisor
    tiling; otherwise falls back to a ragged last tile (Pallas drops the
    out-of-bounds output rows on writeback).
    """
    if n <= 8:
        return n, 1                       # block == full dim, single step
    min_steps = max(_cdiv(n, TILE_N_MAX), 2)
    # Prefer an exact tiling (no ragged tail) if one exists nearby.
    for steps in range(min_steps, min_steps + 8):
        tile = n // steps
        if tile >= 8 and tile % 8 == 0 and tile * steps == n:
            return tile, steps
    # Ragged fallback: last tile's OOB rows are masked by Pallas.
    tile = _round_up(_cdiv(n, min_steps), 8)
    return tile, _cdiv(n, tile)


def _fused_linear_kernel(x_ref, w_ref, b_ref, out_ref):
    """out = x @ W + b for one row tile.

    x_ref:   [tile_n, 32]    f32  (row tile, pipelined over the grid)
    w_ref:   [32, 1434]      f32  (folded W1 @ W2, VMEM-resident: const index_map)
    b_ref:   [1, 1434]       f32  (folded b1 @ W2 + b2)
    out_ref: [tile_n, 1434]  f32
    """
    y = jnp.dot(x_ref[...], w_ref[...], preferred_element_type=jnp.float32)
    out_ref[...] = (y + b_ref[...]).astype(out_ref.dtype)


def fold_params(params):
    """One-time (parameter-load time) algebraic fold of the two Linears.

    Valid because Dropout(0.5) is identity in eval mode.
    """
    w1 = params["w1"].astype(jnp.float32)            # [32, 150]
    b1 = params["b1"].astype(jnp.float32)            # [150]
    w2 = params["w2"].astype(jnp.float32)            # [150, 1434]
    b2 = params["b2"].astype(jnp.float32)            # [1434]
    # TODO(synk): training-mode Dropout(0.5) (random mask + 2x rescale of the
    # 150-dim hidden) cannot be expressed after folding; eval-mode only.
    w = w1 @ w2                                      # [32, 1434]
    b = (b1 @ w2 + b2).reshape(1, OUT_DIM)           # [1, 1434]
    return {"w": w, "b": b}


@functools.partial(jax.jit, static_argnames=("latent_mode",))
def lipsync3d_mesh_forward(spec, fused_params, latent_mode=False):
    """Forward matching Lipsync3DMesh.forward (eval mode).

    spec:         float array whose element count is a multiple of 32.
    fused_params: output of fold_params() (precomputed once).
    """
    assert spec.size % IN_DIM == 0, "spec numel must be a multiple of 32"
    latent = spec.reshape(-1, IN_DIM).astype(jnp.float32)   # View([-1, 32])
    if latent_mode:
        return latent

    n = latent.shape[0]
    w = fused_params["w"]                            # [32, 1434]
    b = fused_params["b"]                            # [1, 1434]

    tile_n, grid_steps = _choose_tiling(n)

    out = pl.pallas_call(
        _fused_linear_kernel,
        out_shape=jax.ShapeDtypeStruct((n, OUT_DIM), jnp.float32),
        grid_spec=pltpu.PrefetchScalarGridSpec(
            num_scalar_prefetch=0,
            grid=(grid_steps,),
            in_specs=[
                pl.BlockSpec((tile_n, IN_DIM), lambda i: (i, 0)),    # row tile
                pl.BlockSpec((IN_DIM, OUT_DIM), lambda i: (0, 0)),   # resident W
                pl.BlockSpec((1, OUT_DIM), lambda i: (0, 0)),        # resident b
            ],
            out_specs=pl.BlockSpec((tile_n, OUT_DIM), lambda i: (i, 0)),
        ),
        compiler_params=pltpu.CompilerParams(
            dimension_semantics=("parallel",),       # megacore split on v7x
            vmem_limit_bytes=32 * 1024 * 1024,
        ),
    )(latent, w, b)

    return out                                       # exactly (n, 1434), no trim


def init_params(key):
    """Deterministic init mirroring nn.Linear default (uniform +-1/sqrt(fan_in))."""
    k1, k2, k3, k4 = jax.random.split(key, 4)
    lim1 = 1.0 / jnp.sqrt(jnp.float32(IN_DIM))
    lim2 = 1.0 / jnp.sqrt(jnp.float32(HID_DIM))
    return {
        "w1": jax.random.uniform(k1, (IN_DIM, HID_DIM), jnp.float32, -lim1, lim1),
        "b1": jax.random.uniform(k2, (HID_DIM,), jnp.float32, -lim1, lim1),
        "w2": jax.random.uniform(k3, (HID_DIM, OUT_DIM), jnp.float32, -lim2, lim2),
        "b2": jax.random.uniform(k4, (OUT_DIM,), jnp.float32, -lim2, lim2),
    }


if __name__ == "__main__":
    key = jax.random.PRNGKey(0)
    pkey, xkey = jax.random.split(key)
    params = init_params(pkey)
    fused = fold_params(params)          # hoisted: done once, not per forward

    # spec: [30, 20, 32] -> view(-1, 32) -> [600, 32]
    # Adaptive tiling picks tile=200, grid=3 (exact, zero padded rows).
    spec = jax.random.normal(xkey, (30, 20, 32), dtype=jnp.float32)

    out = lipsync3d_mesh_forward(spec, fused)
    out = jax.block_until_ready(out)

    # Pure-JAX reference of the original (unfused) two-Linear forward.
    latent = spec.reshape(-1, IN_DIM)
    ref = (latent @ params["w1"] + params["b1"]) @ params["w2"] + params["b2"]
    assert out.shape == (600, OUT_DIM), out.shape
    assert jnp.allclose(out, ref, atol=1e-4, rtol=1e-4), "mismatch vs reference"

    # latentMode=True path (pure reshape, no kernel needed).
    latent_out = lipsync3d_mesh_forward(spec, fused, latent_mode=True)
    assert latent_out.shape == (600, IN_DIM)

    print("KERNEL_OK")
</pallas_src>

<mosaic_0001>
module attributes {stable_mosaic.version = 11 : i64} {
  func.func @_fused_linear_kernel(%arg0: i32, %arg1: memref<200x32xf32, #tpu.memory_space<vmem>>, %arg2: memref<32x1434xf32, #tpu.memory_space<vmem>>, %arg3: memref<1x1434xf32, #tpu.memory_space<vmem>>, %arg4: memref<200x1434xf32, #tpu.memory_space<vmem>>) attributes {dimension_semantics = [#tpu.dimension_semantics<parallel>], iteration_bounds = array<i64: 3>, scalar_prefetch = 0 : i64, scratch_operands = 0 : i64, tpu.core_type = #tpu.core_type<tc>, window_params = [{transform_indices = @transform_0, window_bounds = array<i64: 200, 32>}, {pipeline_mode = #tpu.pipeline_mode<synchronous>, transform_indices = @transform_1, window_bounds = array<i64: 32, 1434>}, {pipeline_mode = #tpu.pipeline_mode<synchronous>, transform_indices = @transform_2, window_bounds = array<i64: 1, 1434>}, {transform_indices = @transform_3, window_bounds = array<i64: 200, 1434>}]} {
    %c0 = arith.constant 0 : index
    %c0_0 = arith.constant 0 : index
    %0 = vector.load %arg1[%c0, %c0_0] : memref<200x32xf32, #tpu.memory_space<vmem>>, vector<200x32xf32>
    %c0_1 = arith.constant 0 : index
    %c0_2 = arith.constant 0 : index
    %1 = vector.load %arg2[%c0_1, %c0_2] : memref<32x1434xf32, #tpu.memory_space<vmem>>, vector<32x1434xf32>
    %cst = arith.constant dense<0.000000e+00> : vector<200x1434xf32>
    %2 = tpu.matmul %0, %1, %cst {dimension_numbers = #tpu.dot_dimension_numbers<[1], [0], [0], [1], [0, 0, 1, 1], [], []>} : vector<200x32xf32>, vector<32x1434xf32>, vector<200x1434xf32> -> vector<200x1434xf32>
    %c0_3 = arith.constant 0 : index
    %c0_4 = arith.constant 0 : index
    %3 = vector.load %arg3[%c0_3, %c0_4] : memref<1x1434xf32, #tpu.memory_space<vmem>>, vector<1x1434xf32>
    %4 = vector.broadcast %3 : vector<1x1434xf32> to vector<200x1434xf32>
    %5 = arith.addf %2, %4 : vector<200x1434xf32>
    %c0_5 = arith.constant 0 : index
    %c0_6 = arith.constant 0 : index
    %6 = vector.load %arg4[%c0_5, %c0_6] : memref<200x1434xf32, #tpu.memory_space<vmem>>, vector<200x1434xf32>
    tpu.vector_store %arg4[%c0_5, %c0_6], %5 {strides = array<i32>} : memref<200x1434xf32, #tpu.memory_space<vmem>>, vector<200x1434xf32>,
    return
  }
  func.func @transform_0(%arg0: i32) -> (i32, i32) {
    %c0_i32 = arith.constant 0 : i32
    %c0_i32_0 = arith.constant 0 : i32
    return %arg0, %c0_i32 : i32, i32
  }
  func.func @transform_1(%arg0: i32) -> (i32, i32) {
    %c0_i32 = arith.constant 0 : i32
    %c0_i32_0 = arith.constant 0 : i32
    %c0_i32_1 = arith.constant 0 : i32
    return %c0_i32, %c0_i32_0 : i32, i32
  }
  func.func @transform_2(%arg0: i32) -> (i32, i32) {
    %c0_i32 = arith.constant 0 : i32
    %c0_i32_0 = arith.constant 0 : i32
    %c0_i32_1 = arith.constant 0 : i32
    return %c0_i32, %c0_i32_0 : i32, i32
  }
  func.func @transform_3(%arg0: i32) -> (i32, i32) {
    %c0_i32 = arith.constant 0 : i32
    %c0_i32_0 = arith.constant 0 : i32
    return %arg0, %c0_i32 : i32, i32
  }
}

</mosaic_0001>

<llo_original>
// kernel: lipsync3d_mesh_forward.1
$region0: #{lipsync3d_mesh_forward.1}
  #allocation0 [shape = 'u32[]', space=smem, size = 0x4, offset = 0x4, fixed_abs, tag = 'smem constant byte address 0x4 - core index']
  #allocation1 [shape = 'u32[72,128]{1,0:T(1,128)}', space=vmem, size = 0x9000, scoped, tag = 'internal scratch']
  %s0 = inlined_call_operand.vmem [shape: f32[600,32], index: 0, kind: input, shape index: {}]
  %s1 = inlined_call_operand.hbm [shape: f32[32,1434], index: 1, kind: input, shape index: {}]
  %s2 = inlined_call_operand.hbm [shape: f32[1,1434], index: 2, kind: input, shape index: {}]
  %s3 = inlined_call_operand.hbm [shape: f32[600,1434], index: 3, kind: output, shape index: {}]
  %s4 = sld [smem:[#allocation0]]
  $region53: #{lipsync3d_mesh_forward.1} parent=0
    _
  %s6 = ssub.s32 1, %s4
  %s7 = scalar_select 0, %s6, %s4
  $region1: #{lipsync3d_mesh_forward.1} parent=0
    #allocation2 [shape = 'u8[196608]{0}', space=vmem, size = 0x30000, scoped, tag = 'input window, operand 1, single buffered']
    #allocation3 [shape = 's32[2]{0}', space=sflag, size = 0x8, scoped, tag = 'scoped memory for lipsync3d_mesh_forward.1']
    #allocation4 [shape = 's32[2]{0}', space=sflag, size = 0x8, scoped, tag = 'scoped memory for lipsync3d_mesh_forward.1']
    #allocation5 [shape = 'u8[6144]{0}', space=vmem, size = 0x1800, scoped, tag = 'input window, operand 2, single buffered']
    #allocation6 [shape = 's32[1]{0}', space=sflag, size = 0x4, scoped, tag = 'scoped memory for lipsync3d_mesh_forward.1']
    #allocation7 [shape = 'u8[2457600]{0}', space=vmem, size = 0x258000, scoped, tag = 'output window, operand 0']
    %8 = vsyncpa [#allocation3], 0
    %9 = vsyncpa [#allocation6], 0
    %10 = vsyncpa [#allocation4], 0
    %s11 = scalar_lea.sflag [#allocation4], 1
    %12 = vsyncpa %s11, 0
    loop: start=0, step=1, limit=5
    $region2: #{lipsync3d_mesh_forward.1} parent=1 // loop_pre_header
      _
    $region3: #{lipsync3d_mesh_forward.1} parent=1 // loop_header
      %s14 = sphi 0, %s18
      %p15 = scmp.ge.s32.totalorder %s14, 5
      %s24 = sphi 0, %s26
      %s27 = sphi 0, %s24
      %s28 = sphi 0, %s27
      %s44 = sphi 0, %s28
      %s48 = sphi 0, %s48
      %s50 = sphi 0, %s48
      %s51 = sphi 0, %s50
      %s65 = sphi 0, %s51
      %s69 = sphi 0, %s69
      %s71 = sphi 0, %s69
      %s72 = sphi 0, %s71
      %s86 = sphi 0, %s72
      %s92 = sphi 0, %s94
      %s95 = sphi 0, %s92
      %s96 = sphi 0, %s95
      %s112 = sphi 0, %s96
    $region4: #{lipsync3d_mesh_forward.1} parent=1 // loop_header_branch
      %17 = sbr.rel (%p15) target = $region8
    $region5: #{lipsync3d_mesh_forward.1} parent=1 // loop_body
      %s19 = ssub.s32 %s14, 1
      %s20 = ssub.s32 %s14, 2
      %s21 = sadd.s32 %s14, 1
      %s22 = ssub.s32 %s14, %s21
      %p23 = scmp.eq.s32.totalorder %s22, 0
      %s25 = sadd.s32 %s24, 1
      %s26 = scalar_select %p23, %s24, %s25
      %p29 = pneg %p23
      %p30 = scmp.eq.s32.totalorder %s14, 2
      %p31 = por %p29, %p30
      %p32 = scmp.ne.s32.totalorder %s24, %s27
      %p33 = scmp.eq.s32.totalorder %s14, 0
      %p34 = por %p32, %p33
      %p35 = scmp.ne.s32.totalorder %s24, %s27
      %p36 = scmp.eq.s32.totalorder %s19, 2
      %p37 = por %p35, %p36
      %p38 = scmp.ne.s32.totalorder %s27, %s28
      %p39 = scmp.eq.s32.totalorder %s19, 0
      %p40 = por %p38, %p39
      %p41 = scmp.ne.s32.totalorder %s27, %s28
      %p42 = scmp.eq.s32.totalorder %s20, 2
      %p43 = por %p41, %p42
      %p45 = scmp.ne.s32.totalorder %s28, %s44
      %p46 = scmp.eq.s32.totalorder %s20, 0
      %p47 = por %p45, %p46
      %s49 = sadd.s32 %s48, 1
      %p52 = scmp.eq.s32.totalorder %s14, 2
      %p53 = scmp.ne.s32.totalorder %s48, %s50
      %p54 = scmp.eq.s32.totalorder %s14, 0
      %p55 = por %p53, %p54
      %p56 = scmp.ne.s32.totalorder %s48, %s50
      %p57 = scmp.eq.s32.totalorder %s19, 2
      %p58 = por %p56, %p57
      %p59 = scmp.ne.s32.totalorder %s50, %s51
      %p60 = scmp.eq.s32.totalorder %s19, 0
      %p61 = por %p59, %p60
      %p62 = scmp.ne.s32.totalorder %s50, %s51
      %p63 = scmp.eq.s32.totalorder %s20, 2
      %p64 = por %p62, %p63
      %p66 = scmp.ne.s32.totalorder %s51, %s65
      %p67 = scmp.eq.s32.totalorder %s20, 0
      %p68 = por %p66, %p67
      %s70 = sadd.s32 %s69, 1
      %p73 = scmp.eq.s32.totalorder %s14, 2
      %p74 = scmp.ne.s32.totalorder %s69, %s71
      %p75 = scmp.eq.s32.totalorder %s14, 0
      %p76 = por %p74, %p75
      %p77 = scmp.ne.s32.totalorder %s69, %s71
      %p78 = scmp.eq.s32.totalorder %s19, 2
      %p79 = por %p77, %p78
      %p80 = scmp.ne.s32.totalorder %s71, %s72
      %p81 = scmp.eq.s32.totalorder %s19, 0
      %p82 = por %p80, %p81
      %p83 = scmp.ne.s32.totalorder %s71, %s72
      %p84 = scmp.eq.s32.totalorder %s20, 2
      %p85 = por %p83, %p84
      %p87 = scmp.ne.s32.totalorder %s72, %s86
      %p88 = scmp.eq.s32.totalorder %s20, 0
      %p89 = por %p87, %p88
      %s90 = ssub.s32 %s14, %s21
      %p91 = scmp.eq.s32.totalorder %s90, 0
      %s93 = sadd.s32 %s92, 1
      %s94 = scalar_select %p91, %s92, %s93
      %p97 = pneg %p91
      %p98 = scmp.eq.s32.totalorder %s14, 2
      %p99 = por %p97, %p98
      %p100 = scmp.ne.s32.totalorder %s92, %s95
      %p101 = scmp.eq.s32.totalorder %s14, 0
      %p102 = por %p100, %p101
      %p103 = scmp.ne.s32.totalorder %s92, %s95
      %p104 = scmp.eq.s32.totalorder %s19, 2
      %p105 = por %p103, %p104
      %p106 = scmp.ne.s32.totalorder %s95, %s96
      %p107 = scmp.eq.s32.totalorder %s19, 0
      %p108 = por %p106, %p107
      %p109 = scmp.ne.s32.totalorder %s95, %s96
      %p110 = scmp.eq.s32.totalorder %s20, 2
      %p111 = por %p109, %p110
      %p113 = scmp.ne.s32.totalorder %s96, %s112
      %p114 = scmp.eq.s32.totalorder %s20, 0
      %p115 = por %p113, %p114
      %p116 = scmp.le.s32.totalorder 1, %s14
      %p117 = scmp.lt.s32.totalorder %s14, 4
      %p118 = pnand %p116, %p117
      %p119 = pneg %p118
      // Predicated region
      $region9: #{lipsync3d_mesh_forward.1} parent=5 // pred_check
        _
      $region10: #{lipsync3d_mesh_forward.1} parent=5 // pred_check_branch
        %121 = sbr.rel (%p118) target = $region12
      $region11: #{lipsync3d_mesh_forward.1} parent=5 // pred_region
        %s122 = ssub.s32 %s14, 1
        // Predicated region
        $region13: #{lipsync3d_mesh_forward.1} parent=11 // pred_check
          %p123 = pneg %p61
        $region14: #{lipsync3d_mesh_forward.1} parent=11 // pred_check_branch
          %125 = sbr.rel (%p123) target = $region16
        $region15: #{lipsync3d_mesh_forward.1} parent=11 // pred_region
          %127 = vsyncadd [#allocation3], 0
          %s128 = sshll.u32 %s1, 4
          %s129 = int_to_ptr.hbm [resolvable:$true] %s128
          %s130 = sshll.u32 [#allocation2], 4
          %s131 = int_to_ptr.vmem [resolvable:$true] %s130
          %136 = dma.hbm_to_vmem [thread:$0]  %s129, 6144, %s131, [#allocation3], 1536, 1536, 96
        $region16: #{lipsync3d_mesh_forward.1} parent=11 // pred_fallthru
          _
        // Predicated region
        $region17: #{lipsync3d_mesh_forward.1} parent=11 // pred_check
          %p137 = pneg %p82
        $region18: #{lipsync3d_mesh_forward.1} parent=11 // pred_check_branch
          %139 = sbr.rel (%p137) target = $region20
        $region19: #{lipsync3d_mesh_forward.1} parent=11 // pred_region
          %141 = vsyncadd [#allocation6], 0
          %s143 = sshll.u32 %s2, 4
          %s144 = int_to_ptr.hbm [resolvable:$true] %s143
          %s145 = sshll.u32 [#allocation5], 4
          %s146 = int_to_ptr.vmem [resolvable:$true] %s145
          %148 = dma.hbm_to_vmem [thread:$0]  %s144, 192, %s146, [#allocation6]
        $region20: #{lipsync3d_mesh_forward.1} parent=11 // pred_fallthru
          _
      $region12: #{lipsync3d_mesh_forward.1} parent=5 // pred_fallthru
        _
      %p149 = scmp.lt.s32.totalorder %s14, 3
      // Predicated region
      $region21: #{lipsync3d_mesh_forward.1} parent=5 // pred_check
        %p150 = pneg %p149
      $region22: #{lipsync3d_mesh_forward.1} parent=5 // pred_check_branch
        %152 = sbr.rel (%p150) target = $region24
      $region23: #{lipsync3d_mesh_forward.1} parent=5 // pred_region
        // Predicated region
        $region25: #{lipsync3d_mesh_forward.1} parent=23 // pred_check
          %p153 = pneg %p34
        $region26: #{lipsync3d_mesh_forward.1} parent=23 // pred_check_branch
          %155 = sbr.rel (%p153) target = $region28
        $region27: #{lipsync3d_mesh_forward.1} parent=23 // pred_region
          %s156 = smul.u32 25, %s14
          %p157 = scmp.lt.s32.totalorder %s156, 74
          %s158 = scalar_select %p157, %s156, 74
          %s159 = smul.addr %s158, 8
          %s160 = scalar_lea.vmem %s0, %s159
          %s161 = smul.u32 25, %s14
        $region28: #{lipsync3d_mesh_forward.1} parent=23 // pred_fallthru
          _
      $region24: #{lipsync3d_mesh_forward.1} parent=5 // pred_fallthru
        _
      %p162 = scmp.le.s32.totalorder 1, %s14
      %p163 = scmp.lt.s32.totalorder %s14, 4
      %p164 = pnand %p162, %p163
      %p165 = pneg %p164
      // Predicated region
      $region29: #{lipsync3d_mesh_forward.1} parent=5 // pred_check
        _
      $region30: #{lipsync3d_mesh_forward.1} parent=5 // pred_check_branch
        %167 = sbr.rel (%p164) target = $region32
      $region31: #{lipsync3d_mesh_forward.1} parent=5 // pred_region
        %s168 = ssub.s32 %s14, 1
        // Predicated region
        $region33: #{lipsync3d_mesh_forward.1} parent=31 // pred_check
          %p169 = pneg %p61
        $region34: #{lipsync3d_mesh_forward.1} parent=31 // pred_check_branch
          %171 = sbr.rel (%p169) target = $region36
        $region35: #{lipsync3d_mesh_forward.1} parent=31 // pred_region
          %173 = dma.done [#allocation3], 6144
        $region36: #{lipsync3d_mesh_forward.1} parent=31 // pred_fallthru
          _
        // Predicated region
        $region37: #{lipsync3d_mesh_forward.1} parent=31 // pred_check
          %p174 = pneg %p82
        $region38: #{lipsync3d_mesh_forward.1} parent=31 // pred_check_branch
          %176 = sbr.rel (%p174) target = $region40
        $region39: #{lipsync3d_mesh_forward.1} parent=31 // pred_region
          %178 = dma.done [#allocation6], 192
        $region40: #{lipsync3d_mesh_forward.1} parent=31 // pred_fallthru
          _
        %s179 = smul.u32 25, %s19
        %p180 = scmp.lt.s32.totalorder %s179, 74
        %s181 = scalar_select %p180, %s179, 74
        %s182 = smul.addr %s181, 8
        %s183 = scalar_lea.vmem %s0, %s182
        %p184 = pneg %p40
        %p185 = pneg %p37
        %p186 = pneg %p61
        %p187 = pneg %p58
        %p188 = pneg %p82
        %p189 = pneg %p79
        %p190 = pneg %p108
        %p191 = pneg %p105
        %s192 = sand.u32 %s95, 1
        %s193 = scalar_lea.sflag [#allocation4], %s192
        %s194 = sand.u32 %s95, 1
        %s195 = smul.addr %s194, 2400
        %s196 = scalar_lea.vmem [#allocation7], %s195
        %s197 = smul.u32 25, %s19
        %p198 = scmp.lt.s32.totalorder %s197, 74
        %s199 = scalar_select %p198, %s197, 74
        %s200 = smul.addr %s199, 8
        %s201 = scalar_lea.vmem %s0, %s200
        %s202 = smul.u32 25, %s19
        %s203 = smul.u32 25, %s19
        %v204 = vld [vmem:[%s201] sm:$0xff]
        %v205 = vld [vmem:[%s201 + $0x8] sm:$0xff]
        %v206 = vld [vmem:[%s201 + $0x10] sm:$0xff]
        %v207 = vld [vmem:[%s201 + $0x18] sm:$0xff]
        %v208 = vld [vmem:[%s201 + $0x20] sm:$0xff]
        %v209 = vld [vmem:[%s201 + $0x28] sm:$0xff]
        %v210 = vld [vmem:[%s201 + $0x30] sm:$0xff]
        %v211 = vld [vmem:[%s201 + $0x38] sm:$0xff]
        %v212 = vld [vmem:[%s201 + $0x40] sm:$0xff]
        %v213 = vld [vmem:[%s201 + $0x48] sm:$0xff]
        %v214 = vld [vmem:[%s201 + $0x50] sm:$0xff]
        %v215 = vld [vmem:[%s201 + $0x58] sm:$0xff]
        %v216 = vld [vmem:[%s201 + $0x60] sm:$0xff]
        %v217 = vld [vmem:[%s201 + $0x68] sm:$0xff]
        %v218 = vld [vmem:[%s201 + $0x70] sm:$0xff]
        %v219 = vld [vmem:[%s201 + $0x78] sm:$0xff]
        %v220 = vld [vmem:[%s201 + $0x80] sm:$0xff]
        %v221 = vld [vmem:[%s201 + $0x88] sm:$0xff]
        %v222 = vld [vmem:[%s201 + $0x90] sm:$0xff]
        %v223 = vld [vmem:[%s201 + $0x98] sm:$0xff]
        %v224 = vld [vmem:[%s201 + $0xa0] sm:$0xff]
        %v225 = vld [vmem:[%s201 + $0xa8] sm:$0xff]
        %v226 = vld [vmem:[%s201 + $0xb0] sm:$0xff]
        %v227 = vld [vmem:[%s201 + $0xb8] sm:$0xff]
        %v228 = vld [vmem:[%s201 + $0xc0] sm:$0xff]
        %v229 = vld [vmem:[#allocation2] sm:$0xff]
        %v230 = vld [vmem:[#allocation2 + $0x8] sm:$0xff]
        %v231 = vld [vmem:[#allocation2 + $0x10] sm:$0xff]
        %v232 = vld [vmem:[#allocation2 + $0x18] sm:$0xff]
        %v233 = vld [vmem:[#allocation2 + $0x20] sm:$0xff]
        %v234 = vld [vmem:[#allocation2 + $0x28] sm:$0xff]
        %v235 = vld [vmem:[#allocation2 + $0x30] sm:$0xff]
        %v236 = vld [vmem:[#allocation2 + $0x38] sm:$0xff]
        %v237 = vld [vmem:[#allocation2 + $0x40] sm:$0xff]
        %v238 = vld [vmem:[#allocation2 + $0x48] sm:$0xff]
        %v239 = vld [vmem:[#allocation2 + $0x50] sm:$0xff]
        %v240 = vld [vmem:[#allocation2 + $0x58] sm:$0xff]
        %v241 = vld [vmem:[#allocation2 + $0x60] sm:$0xff]
        %v242 = vld [vmem:[#allocation2 + $0x68] sm:$0xff]
        %v243 = vld [vmem:[#allocation2 + $0x70] sm:$0xff]
        %v244 = vld [vmem:[#allocation2 + $0x78] sm:$0xff]
        %v245 = vld [vmem:[#allocation2 + $0x80] sm:$0xff]
        %v246 = vld [vmem:[#allocation2 + $0x88] sm:$0xff]
        %v247 = vld [vmem:[#allocation2 + $0x90] sm:$0xff]
        %v248 = vld [vmem:[#allocation2 + $0x98] sm:$0xff]
        %v249 = vld [vmem:[#allocation2 + $0xa0] sm:$0xff]
        %v250 = vld [vmem:[#allocation2 + $0xa8] sm:$0xff]
        %v251 = vld [vmem:[#allocation2 + $0xb0] sm:$0xff]
        %v252 = vld [vmem:[#allocation2 + $0xb8] sm:$0xff]
        %v253 = vld [vmem:[#allocation2 + $0xc0] sm:$0xff]
        %v254 = vld [vmem:[#allocation2 + $0xc8] sm:$0xff]
        %v255 = vld [vmem:[#allocation2 + $0xd0] sm:$0xff]
        %v256 = vld [vmem:[#allocation2 + $0xd8] sm:$0xff]
        %v257 = vld [vmem:[#allocation2 + $0xe0] sm:$0xff]
        %v258 = vld [vmem:[#allocation2 + $0xe8] sm:$0xff]
        %v259 = vld [vmem:[#allocation2 + $0xf0] sm:$0xff]
        %v260 = vld [vmem:[#allocation2 + $0xf8] sm:$0xff]
        %v261 = vld [vmem:[#allocation2 + $0x100] sm:$0xff]
        %v262 = vld [vmem:[#allocation2 + $0x108] sm:$0xff]
        %v263 = vld [vmem:[#allocation2 + $0x110] sm:$0xff]
        %v264 = vld [vmem:[#allocation2 + $0x118] sm:$0xff]
        %v265 = vld [vmem:[#allocation2 + $0x120] sm:$0xff]
        %v266 = vld [vmem:[#allocation2 + $0x128] sm:$0xff]
        %v267 = vld [vmem:[#allocation2 + $0x130] sm:$0xff]
        %v268 = vld [vmem:[#allocation2 + $0x138] sm:$0xff]
        %v269 = vld [vmem:[#allocation2 + $0x140] sm:$0xff]
        %v270 = vld [vmem:[#allocation2 + $0x148] sm:$0xff]
        %v271 = vld [vmem:[#allocation2 + $0x150] sm:$0xff]
        %v272 = vld [vmem:[#allocation2 + $0x158] sm:$0xff]
        %v273 = vld [vmem:[#allocation2 + $0x160] sm:$0xff]
        %v274 = vld [vmem:[#allocation2 + $0x168] sm:$0xff]
        %v275 = vld [vmem:[#allocation2 + $0x170] sm:$0xff]
        %v276 = vld [vmem:[#allocation2 + $0x178] sm:$0xff]
        %v277 = vld [vmem:[#allocation5] sm:$0xff]
        %v278 = vld [vmem:[#allocation5 + $0x8] sm:$0xf]
        %v281 = vperm.slane %v277, 0
        %v282 = vperm.slane %v277, 1
        %v283 = vperm.slane %v277, 2
        %v284 = vperm.slane %v277, 3
        %v285 = vperm.slane %v277, 4
        %v286 = vperm.slane %v277, 5
        %v287 = vperm.slane %v277, 6
        %v288 = vperm.slane %v277, 7
        %v289 = vperm.slane %v278, 0
        %v290 = vperm.slane %v278, 1
        %v291 = vperm.slane %v278, 2
        %v292 = vperm.slane %v278, 3
        %vm305 = vcmask 261120
        %v307 = vsel %vm305, %v204, 0
        %v310 = vsel %vm305, %v205, 0
        %v313 = vsel %vm305, %v206, 0
        %v316 = vsel %vm305, %v207, 0
        %v319 = vsel %vm305, %v208, 0
        %v322 = vsel %vm305, %v209, 0
        %v325 = vsel %vm305, %v210, 0
        %v328 = vsel %vm305, %v211, 0
        %v331 = vsel %vm305, %v212, 0
        %v334 = vsel %vm305, %v213, 0
        %v337 = vsel %vm305, %v214, 0
        %v340 = vsel %vm305, %v215, 0
        %v343 = vsel %vm305, %v216, 0
        %v346 = vsel %vm305, %v217, 0
        %v349 = vsel %vm305, %v218, 0
        %v352 = vsel %vm305, %v219, 0
        %v355 = vsel %vm305, %v220, 0
        %v358 = vsel %vm305, %v221, 0
        %v361 = vsel %vm305, %v222, 0
        %v364 = vsel %vm305, %v223, 0
        %v367 = vsel %vm305, %v224, 0
        %v370 = vsel %vm305, %v225, 0
        %v373 = vsel %vm305, %v226, 0
        %v376 = vsel %vm305, %v227, 0
        %v379 = vsel %vm305, %v228, 0
        %381 = vmatpush.msra.mxu0 0.0
        %382 = vmatpush.msra.mxu0 0.0
        %383 = vmatpush.msra.mxu0 0.0
        %384 = vmatpush.msra.mxu0 0.0
        %385 = vmatpush.msra.mxu0 0.0
        %386 = vmatpush.msra.mxu0 0.0
        %387 = vmatpush.msra.mxu0 0.0
        %388 = vmatpush.msra.mxu0 0.0
        %389 = vmatpush.msra.mxu0 0.0
        %390 = vmatpush.msra.mxu0 0.0
        %391 = vmatpush.msra.mxu0 0.0
        %392 = vmatpush.msra.mxu0 0.0
        %393 = vmatpush.msra.mxu0 %v265
        %394 = vmatpush.msra.mxu0 %v253
        %395 = vmatpush.msra.mxu0 %v241
        %396 = vmatpush.msra.mxu0 %v229
        %397 = vmatmul.f32.gmra.mxu0 %v307
        %v398 = vpop.f32.mrf.mxu0
        %v399 = vadd.f32 %v281, %v398
        %400 = vmatmul.f32.gmra.mxu0 %v310
        %v401 = vpop.f32.mrf.mxu0
        %v402 = vadd.f32 %v281, %v401
        %403 = vmatmul.f32.gmra.mxu0 %v313
        %v404 = vpop.f32.mrf.mxu0
        %v405 = vadd.f32 %v281, %v404
        %406 = vmatmul.f32.gmra.mxu0 %v316
        %v407 = vpop.f32.mrf.mxu0
        %v408 = vadd.f32 %v281, %v407
        %409 = vmatmul.f32.gmra.mxu0 %v319
        %v410 = vpop.f32.mrf.mxu0
        %v411 = vadd.f32 %v281, %v410
        %412 = vmatmul.f32.gmra.mxu0 %v322
        %v413 = vpop.f32.mrf.mxu0
        %v414 = vadd.f32 %v281, %v413
        %415 = vmatmul.f32.gmra.mxu0 %v325
        %v416 = vpop.f32.mrf.mxu0
        %v417 = vadd.f32 %v281, %v416
        %418 = vmatmul.f32.gmra.mxu0 %v328
        %v419 = vpop.f32.mrf.mxu0
        %v420 = vadd.f32 %v281, %v419
        %421 = vmatmul.f32.gmra.mxu0 %v331
        %v422 = vpop.f32.mrf.mxu0
        %v423 = vadd.f32 %v281, %v422
        %424 = vmatmul.f32.gmra.mxu0 %v334
        %v425 = vpop.f32.mrf.mxu0
        %v426 = vadd.f32 %v281, %v425
        %427 = vmatmul.f32.gmra.mxu0 %v337
        %v428 = vpop.f32.mrf.mxu0
        %v429 = vadd.f32 %v281, %v428
        %430 = vmatmul.f32.gmra.mxu0 %v340
        %v431 = vpop.f32.mrf.mxu0
        %v432 = vadd.f32 %v281, %v431
        %433 = vmatmul.f32.gmra.mxu0 %v343
        %v434 = vpop.f32.mrf.mxu0
        %v435 = vadd.f32 %v281, %v434
        %436 = vmatmul.f32.gmra.mxu0 %v346
        %v437 = vpop.f32.mrf.mxu0
        %v438 = vadd.f32 %v281, %v437
        %439 = vmatmul.f32.gmra.mxu0 %v349
        %v440 = vpop.f32.mrf.mxu0
        %v441 = vadd.f32 %v281, %v440
        %442 = vmatmul.f32.gmra.mxu0 %v352
        %v443 = vpop.f32.mrf.mxu0
        %v444 = vadd.f32 %v281, %v443
        %445 = vmatmul.f32.gmra.mxu0 %v355
        %v446 = vpop.f32.mrf.mxu0
        %v447 = vadd.f32 %v281, %v446
        %448 = vmatmul.f32.gmra.mxu0 %v358
        %v449 = vpop.f32.mrf.mxu0
        %v450 = vadd.f32 %v281, %v449
        %451 = vmatmul.f32.gmra.mxu0 %v361
        %v452 = vpop.f32.mrf.mxu0
        %v453 = vadd.f32 %v281, %v452
        %454 = vmatmul.f32.gmra.mxu0 %v364
        %v455 = vpop.f32.mrf.mxu0
        %v456 = vadd.f32 %v281, %v455
        %457 = vmatmul.f32.gmra.mxu0 %v367
        %v458 = vpop.f32.mrf.mxu0
        %v459 = vadd.f32 %v281, %v458
        %460 = vmatmul.f32.gmra.mxu0 %v370
        %v461 = vpop.f32.mrf.mxu0
        %v462 = vadd.f32 %v281, %v461
        %463 = vmatmul.f32.gmra.mxu0 %v373
        %v464 = vpop.f32.mrf.mxu0
        %v465 = vadd.f32 %v281, %v464
        %466 = vmatmul.f32.gmra.mxu0 %v376
        %v467 = vpop.f32.mrf.mxu0
        %v468 = vadd.f32 %v281, %v467
        %469 = vmatmul.f32.gmra.mxu0 %v379
        %v470 = vpop.f32.mrf.mxu0
        %v471 = vadd.f32 %v281, %v470
        %472 = vdwg.mxu0
        %473 = vmatpush.msra.mxu0 0.0
        %474 = vmatpush.msra.mxu0 0.0
        %475 = vmatpush.msra.mxu0 0.0
        %476 = vmatpush.msra.mxu0 0.0
        %477 = vmatpush.msra.mxu0 0.0
        %478 = vmatpush.msra.mxu0 0.0
        %479 = vmatpush.msra.mxu0 0.0
        %480 = vmatpush.msra.mxu0 0.0
        %481 = vmatpush.msra.mxu0 0.0
        %482 = vmatpush.msra.mxu0 0.0
        %483 = vmatpush.msra.mxu0 0.0
        %484 = vmatpush.msra.mxu0 0.0
        %485 = vmatpush.msra.mxu0 %v266
        %486 = vmatpush.msra.mxu0 %v254
        %487 = vmatpush.msra.mxu0 %v242
        %488 = vmatpush.msra.mxu0 %v230
        %489 = vmatmul.f32.gmra.mxu0 %v307
        %v490 = vpop.f32.mrf.mxu0
        %v491 = vadd.f32 %v282, %v490
        %492 = vmatmul.f32.gmra.mxu0 %v310
        %v493 = vpop.f32.mrf.mxu0
        %v494 = vadd.f32 %v282, %v493
        %495 = vmatmul.f32.gmra.mxu0 %v313
        %v496 = vpop.f32.mrf.mxu0
        %v497 = vadd.f32 %v282, %v496
        %498 = vmatmul.f32.gmra.mxu0 %v316
        %v499 = vpop.f32.mrf.mxu0
        %v500 = vadd.f32 %v282, %v499
        %501 = vmatmul.f32.gmra.mxu0 %v319
        %v502 = vpop.f32.mrf.mxu0
        %v503 = vadd.f32 %v282, %v502
        %504 = vmatmul.f32.gmra.mxu0 %v322
        %v505 = vpop.f32.mrf.mxu0
        %v506 = vadd.f32 %v282, %v505
        %507 = vmatmul.f32.gmra.mxu0 %v325
        %v508 = vpop.f32.mrf.mxu0
        %v509 = vadd.f32 %v282, %v508
        %510 = vmatmul.f32.gmra.mxu0 %v328
        %v511 = vpop.f32.mrf.mxu0
        %v512 = vadd.f32 %v282, %v511
        %513 = vmatmul.f32.gmra.mxu0 %v331
        %v514 = vpop.f32.mrf.mxu0
        %v515 = vadd.f32 %v282, %v514
        %516 = vmatmul.f32.gmra.mxu0 %v334
        %v517 = vpop.f32.mrf.mxu0
        %v518 = vadd.f32 %v282, %v517
        %519 = vmatmul.f32.gmra.mxu0 %v337
        %v520 = vpop.f32.mrf.mxu0
        %v521 = vadd.f32 %v282, %v520
        %522 = vmatmul.f32.gmra.mxu0 %v340
        %v523 = vpop.f32.mrf.mxu0
        %v524 = vadd.f32 %v282, %v523
        %525 = vmatmul.f32.gmra.mxu0 %v343
        %v526 = vpop.f32.mrf.mxu0
        %v527 = vadd.f32 %v282, %v526
        %528 = vmatmul.f32.gmra.mxu0 %v346
        %v529 = vpop.f32.mrf.mxu0
        %v530 = vadd.f32 %v282, %v529
        %531 = vmatmul.f32.gmra.mxu0 %v349
        %v532 = vpop.f32.mrf.mxu0
        %v533 = vadd.f32 %v282, %v532
        %534 = vmatmul.f32.gmra.mxu0 %v352
        %v535 = vpop.f32.mrf.mxu0
        %v536 = vadd.f32 %v282, %v535
        %537 = vmatmul.f32.gmra.mxu0 %v355
        %v538 = vpop.f32.mrf.mxu0
        %v539 = vadd.f32 %v282, %v538
        %540 = vmatmul.f32.gmra.mxu0 %v358
        %v541 = vpop.f32.mrf.mxu0
        %v542 = vadd.f32 %v282, %v541
        %543 = vmatmul.f32.gmra.mxu0 %v361
        %v544 = vpop.f32.mrf.mxu0
        %v545 = vadd.f32 %v282, %v544
        %546 = vmatmul.f32.gmra.mxu0 %v364
        %v547 = vpop.f32.mrf.mxu0
        %v548 = vadd.f32 %v282, %v547
        %549 = vmatmul.f32.gmra.mxu0 %v367
        %v550 = vpop.f32.mrf.mxu0
        %v551 = vadd.f32 %v282, %v550
        %552 = vmatmul.f32.gmra.mxu0 %v370
        %v553 = vpop.f32.mrf.mxu0
        %v554 = vadd.f32 %v282, %v553
        %555 = vmatmul.f32.gmra.mxu0 %v373
        %v556 = vpop.f32.mrf.mxu0
        %v557 = vadd.f32 %v282, %v556
        %558 = vmatmul.f32.gmra.mxu0 %v376
        %v559 = vpop.f32.mrf.mxu0
        %v560 = vadd.f32 %v282, %v559
        %561 = vmatmul.f32.gmra.mxu0 %v379
        %v562 = vpop.f32.mrf.mxu0
        %v563 = vadd.f32 %v282, %v562
        %564 = vdwg.mxu0
        %565 = vmatpush.msra.mxu0 0.0
        %566 = vmatpush.msra.mxu0 0.0
        %567 = vmatpush.msra.mxu0 0.0
        %568 = vmatpush.msra.mxu0 0.0
        %569 = vmatpush.msra.mxu0 0.0
        %570 = vmatpush.msra.mxu0 0.0
        %571 = vmatpush.msra.mxu0 0.0
        %572 = vmatpush.msra.mxu0 0.0
        %573 = vmatpush.msra.mxu0 0.0
        %574 = vmatpush.msra.mxu0 0.0
        %575 = vmatpush.msra.mxu0 0.0
        %576 = vmatpush.msra.mxu0 0.0
        %577 = vmatpush.msra.mxu0 %v267
        %578 = vmatpush.msra.mxu0 %v255
        %579 = vmatpush.msra.mxu0 %v243
        %580 = vmatpush.msra.mxu0 %v231
        %581 = vmatmul.f32.gmra.mxu0 %v307
        %v582 = vpop.f32.mrf.mxu0
        %v583 = vadd.f32 %v283, %v582
        %584 = vmatmul.f32.gmra.mxu0 %v310
        %v585 = vpop.f32.mrf.mxu0
        %v586 = vadd.f32 %v283, %v585
        %587 = vmatmul.f32.gmra.mxu0 %v313
        %v588 = vpop.f32.mrf.mxu0
        %v589 = vadd.f32 %v283, %v588
        %590 = vmatmul.f32.gmra.mxu0 %v316
        %v591 = vpop.f32.mrf.mxu0
        %v592 = vadd.f32 %v283, %v591
        %593 = vmatmul.f32.gmra.mxu0 %v319
        %v594 = vpop.f32.mrf.mxu0
        %v595 = vadd.f32 %v283, %v594
        %596 = vmatmul.f32.gmra.mxu0 %v322
        %v597 = vpop.f32.mrf.mxu0
        %v598 = vadd.f32 %v283, %v597
        %599 = vmatmul.f32.gmra.mxu0 %v325
        %v600 = vpop.f32.mrf.mxu0
        %v601 = vadd.f32 %v283, %v600
        %602 = vmatmul.f32.gmra.mxu0 %v328
        %v603 = vpop.f32.mrf.mxu0
        %v604 = vadd.f32 %v283, %v603
        %605 = vmatmul.f32.gmra.mxu0 %v331
        %v606 = vpop.f32.mrf.mxu0
        %v607 = vadd.f32 %v283, %v606
        %608 = vmatmul.f32.gmra.mxu0 %v334
        %v609 = vpop.f32.mrf.mxu0
        %v610 = vadd.f32 %v283, %v609
        %611 = vmatmul.f32.gmra.mxu0 %v337
        %v612 = vpop.f32.mrf.mxu0
        %v613 = vadd.f32 %v283, %v612
        %614 = vmatmul.f32.gmra.mxu0 %v340
        %v615 = vpop.f32.mrf.mxu0
        %v616 = vadd.f32 %v283, %v615
        %617 = vmatmul.f32.gmra.mxu0 %v343
        %v618 = vpop.f32.mrf.mxu0
        %v619 = vadd.f32 %v283, %v618
        %620 = vmatmul.f32.gmra.mxu0 %v346
        %v621 = vpop.f32.mrf.mxu0
        %v622 = vadd.f32 %v283, %v621
        %623 = vmatmul.f32.gmra.mxu0 %v349
        %v624 = vpop.f32.mrf.mxu0
        %v625 = vadd.f32 %v283, %v624
        %626 = vmatmul.f32.gmra.mxu0 %v352
        %v627 = vpop.f32.mrf.mxu0
        %v628 = vadd.f32 %v283, %v627
        %629 = vmatmul.f32.gmra.mxu0 %v355
        %v630 = vpop.f32.mrf.mxu0
        %v631 = vadd.f32 %v283, %v630
        %632 = vmatmul.f32.gmra.mxu0 %v358
        %v633 = vpop.f32.mrf.mxu0
        %v634 = vadd.f32 %v283, %v633
        %635 = vmatmul.f32.gmra.mxu0 %v361
        %v636 = vpop.f32.mrf.mxu0
        %v637 = vadd.f32 %v283, %v636
        %638 = vmatmul.f32.gmra.mxu0 %v364
        %v639 = vpop.f32.mrf.mxu0
        %v640 = vadd.f32 %v283, %v639
        %641 = vmatmul.f32.gmra.mxu0 %v367
        %v642 = vpop.f32.mrf.mxu0
        %v643 = vadd.f32 %v283, %v642
        %644 = vmatmul.f32.gmra.mxu0 %v370
        %v645 = vpop.f32.mrf.mxu0
        %v646 = vadd.f32 %v283, %v645
        %647 = vmatmul.f32.gmra.mxu0 %v373
        %v648 = vpop.f32.mrf.mxu0
        %v649 = vadd.f32 %v283, %v648
        %650 = vmatmul.f32.gmra.mxu0 %v376
        %v651 = vpop.f32.mrf.mxu0
        %v652 = vadd.f32 %v283, %v651
        %653 = vmatmul.f32.gmra.mxu0 %v379
        %v654 = vpop.f32.mrf.mxu0
        %v655 = vadd.f32 %v283, %v654
        %656 = vdwg.mxu0
        %657 = vmatpush.msra.mxu0 0.0
        %658 = vmatpush.msra.mxu0 0.0
        %659 = vmatpush.msra.mxu0 0.0
        %660 = vmatpush.msra.mxu0 0.0
        %661 = vmatpush.msra.mxu0 0.0
        %662 = vmatpush.msra.mxu0 0.0
        %663 = vmatpush.msra.mxu0 0.0
        %664 = vmatpush.msra.mxu0 0.0
        %665 = vmatpush.msra.mxu0 0.0
        %666 = vmatpush.msra.mxu0 0.0
        %667 = vmatpush.msra.mxu0 0.0
        %668 = vmatpush.msra.mxu0 0.0
        %669 = vmatpush.msra.mxu0 %v268
        %670 = vmatpush.msra.mxu0 %v256
        %671 = vmatpush.msra.mxu0 %v244
        %672 = vmatpush.msra.mxu0 %v232
        %673 = vmatmul.f32.gmra.mxu0 %v307
        %v674 = vpop.f32.mrf.mxu0
        %v675 = vadd.f32 %v284, %v674
        %676 = vmatmul.f32.gmra.mxu0 %v310
        %v677 = vpop.f32.mrf.mxu0
        %v678 = vadd.f32 %v284, %v677
        %679 = vmatmul.f32.gmra.mxu0 %v313
        %v680 = vpop.f32.mrf.mxu0
        %v681 = vadd.f32 %v284, %v680
        %682 = vmatmul.f32.gmra.mxu0 %v316
        %v683 = vpop.f32.mrf.mxu0
        %v684 = vadd.f32 %v284, %v683
        %685 = vmatmul.f32.gmra.mxu0 %v319
        %v686 = vpop.f32.mrf.mxu0
        %v687 = vadd.f32 %v284, %v686
        %688 = vmatmul.f32.gmra.mxu0 %v322
        %v689 = vpop.f32.mrf.mxu0
        %v690 = vadd.f32 %v284, %v689
        %691 = vmatmul.f32.gmra.mxu0 %v325
        %v692 = vpop.f32.mrf.mxu0
        %v693 = vadd.f32 %v284, %v692
        %694 = vmatmul.f32.gmra.mxu0 %v328
        %v695 = vpop.f32.mrf.mxu0
        %v696 = vadd.f32 %v284, %v695
        %697 = vmatmul.f32.gmra.mxu0 %v331
        %v698 = vpop.f32.mrf.mxu0
        %v699 = vadd.f32 %v284, %v698
        %700 = vmatmul.f32.gmra.mxu0 %v334
        %v701 = vpop.f32.mrf.mxu0
        %v702 = vadd.f32 %v284, %v701
        %703 = vmatmul.f32.gmra.mxu0 %v337
        %v704 = vpop.f32.mrf.mxu0
        %v705 = vadd.f32 %v284, %v704
        %706 = vmatmul.f32.gmra.mxu0 %v340
        %v707 = vpop.f32.mrf.mxu0
        %v708 = vadd.f32 %v284, %v707
        %709 = vmatmul.f32.gmra.mxu0 %v343
        %v710 = vpop.f32.mrf.mxu0
        %v711 = vadd.f32 %v284, %v710
        %712 = vmatmul.f32.gmra.mxu0 %v346
        %v713 = vpop.f32.mrf.mxu0
        %v714 = vadd.f32 %v284, %v713
        %715 = vmatmul.f32.gmra.mxu0 %v349
        %v716 = vpop.f32.mrf.mxu0
        %v717 = vadd.f32 %v284, %v716
        %718 = vmatmul.f32.gmra.mxu0 %v352
        %v719 = vpop.f32.mrf.mxu0
        %v720 = vadd.f32 %v284, %v719
        %721 = vmatmul.f32.gmra.mxu0 %v355
        %v722 = vpop.f32.mrf.mxu0
        %v723 = vadd.f32 %v284, %v722
        %724 = vmatmul.f32.gmra.mxu0 %v358
        %v725 = vpop.f32.mrf.mxu0
        %v726 = vadd.f32 %v284, %v725
        %727 = vmatmul.f32.gmra.mxu0 %v361
        %v728 = vpop.f32.mrf.mxu0
        %v729 = vadd.f32 %v284, %v728
        %730 = vmatmul.f32.gmra.mxu0 %v364
        %v731 = vpop.f32.mrf.mxu0
        %v732 = vadd.f32 %v284, %v731
        %733 = vmatmul.f32.gmra.mxu0 %v367
        %v734 = vpop.f32.mrf.mxu0
        %v735 = vadd.f32 %v284, %v734
        %736 = vmatmul.f32.gmra.mxu0 %v370
        %v737 = vpop.f32.mrf.mxu0
        %v738 = vadd.f32 %v284, %v737
        %739 = vmatmul.f32.gmra.mxu0 %v373
        %v740 = vpop.f32.mrf.mxu0
        %v741 = vadd.f32 %v284, %v740
        %742 = vmatmul.f32.gmra.mxu0 %v376
        %v743 = vpop.f32.mrf.mxu0
        %v744 = vadd.f32 %v284, %v743
        %745 = vmatmul.f32.gmra.mxu0 %v379
        %v746 = vpop.f32.mrf.mxu0
        %v747 = vadd.f32 %v284, %v746
        %748 = vdwg.mxu0
        %749 = vmatpush.msra.mxu0 0.0
        %750 = vmatpush.msra.mxu0 0.0
        %751 = vmatpush.msra.mxu0 0.0
        %752 = vmatpush.msra.mxu0 0.0
        %753 = vmatpush.msra.mxu0 0.0
        %754 = vmatpush.msra.mxu0 0.0
        %755 = vmatpush.msra.mxu0 0.0
        %756 = vmatpush.msra.mxu0 0.0
        %757 = vmatpush.msra.mxu0 0.0
        %758 = vmatpush.msra.mxu0 0.0
        %759 = vmatpush.msra.mxu0 0.0
        %760 = vmatpush.msra.mxu0 0.0
        %761 = vmatpush.msra.mxu0 %v269
        %762 = vmatpush.msra.mxu0 %v257
        %763 = vmatpush.msra.mxu0 %v245
        %764 = vmatpush.msra.mxu0 %v233
        %765 = vmatmul.f32.gmra.mxu0 %v307
        %v766 = vpop.f32.mrf.mxu0
        %v767 = vadd.f32 %v285, %v766
        %768 = vmatmul.f32.gmra.mxu0 %v310
        %v769 = vpop.f32.mrf.mxu0
        %v770 = vadd.f32 %v285, %v769
        %771 = vmatmul.f32.gmra.mxu0 %v313
        %v772 = vpop.f32.mrf.mxu0
        %v773 = vadd.f32 %v285, %v772
        %774 = vmatmul.f32.gmra.mxu0 %v316
        %v775 = vpop.f32.mrf.mxu0
        %v776 = vadd.f32 %v285, %v775
        %777 = vmatmul.f32.gmra.mxu0 %v319
        %v778 = vpop.f32.mrf.mxu0
        %v779 = vadd.f32 %v285, %v778
        %780 = vmatmul.f32.gmra.mxu0 %v322
        %v781 = vpop.f32.mrf.mxu0
        %v782 = vadd.f32 %v285, %v781
        %783 = vmatmul.f32.gmra.mxu0 %v325
        %v784 = vpop.f32.mrf.mxu0
        %v785 = vadd.f32 %v285, %v784
        %786 = vmatmul.f32.gmra.mxu0 %v328
        %v787 = vpop.f32.mrf.mxu0
        %v788 = vadd.f32 %v285, %v787
        %789 = vmatmul.f32.gmra.mxu0 %v331
        %v790 = vpop.f32.mrf.mxu0
        %v791 = vadd.f32 %v285, %v790
        %792 = vmatmul.f32.gmra.mxu0 %v334
        %v793 = vpop.f32.mrf.mxu0
        %v794 = vadd.f32 %v285, %v793
        %795 = vmatmul.f32.gmra.mxu0 %v337
        %v796 = vpop.f32.mrf.mxu0
        %v797 = vadd.f32 %v285, %v796
        %798 = vmatmul.f32.gmra.mxu0 %v340
        %v799 = vpop.f32.mrf.mxu0
        %v800 = vadd.f32 %v285, %v799
        %801 = vmatmul.f32.gmra.mxu0 %v343
        %v802 = vpop.f32.mrf.mxu0
        %v803 = vadd.f32 %v285, %v802
        %804 = vmatmul.f32.gmra.mxu0 %v346
        %v805 = vpop.f32.mrf.mxu0
        %v806 = vadd.f32 %v285, %v805
        %807 = vmatmul.f32.gmra.mxu0 %v349
        %v808 = vpop.f32.mrf.mxu0
        %v809 = vadd.f32 %v285, %v808
        %810 = vmatmul.f32.gmra.mxu0 %v352
        %v811 = vpop.f32.mrf.mxu0
        %v812 = vadd.f32 %v285, %v811
        %813 = vmatmul.f32.gmra.mxu0 %v355
        %v814 = vpop.f32.mrf.mxu0
        %v815 = vadd.f32 %v285, %v814
        %816 = vmatmul.f32.gmra.mxu0 %v358
        %v817 = vpop.f32.mrf.mxu0
        %v818 = vadd.f32 %v285, %v817
        %819 = vmatmul.f32.gmra.mxu0 %v361
        %v820 = vpop.f32.mrf.mxu0
        %v821 = vadd.f32 %v285, %v820
        %822 = vmatmul.f32.gmra.mxu0 %v364
        %v823 = vpop.f32.mrf.mxu0
        %v824 = vadd.f32 %v285, %v823
        %825 = vmatmul.f32.gmra.mxu0 %v367
        %v826 = vpop.f32.mrf.mxu0
        %v827 = vadd.f32 %v285, %v826
        %828 = vmatmul.f32.gmra.mxu0 %v370
        %v829 = vpop.f32.mrf.mxu0
        %v830 = vadd.f32 %v285, %v829
        %831 = vmatmul.f32.gmra.mxu0 %v373
        %v832 = vpop.f32.mrf.mxu0
        %v833 = vadd.f32 %v285, %v832
        %834 = vmatmul.f32.gmra.mxu0 %v376
        %v835 = vpop.f32.mrf.mxu0
        %v836 = vadd.f32 %v285, %v835
        %837 = vmatmul.f32.gmra.mxu0 %v379
        %v838 = vpop.f32.mrf.mxu0
        %v839 = vadd.f32 %v285, %v838
        %840 = vdwg.mxu0
        %841 = vmatpush.msra.mxu0 0.0
        %842 = vmatpush.msra.mxu0 0.0
        %843 = vmatpush.msra.mxu0 0.0
        %844 = vmatpush.msra.mxu0 0.0
        %845 = vmatpush.msra.mxu0 0.0
        %846 = vmatpush.msra.mxu0 0.0
        %847 = vmatpush.msra.mxu0 0.0
        %848 = vmatpush.msra.mxu0 0.0
        %849 = vmatpush.msra.mxu0 0.0
        %850 = vmatpush.msra.mxu0 0.0
        %851 = vmatpush.msra.mxu0 0.0
        %852 = vmatpush.msra.mxu0 0.0
        %853 = vmatpush.msra.mxu0 %v270
        %854 = vmatpush.msra.mxu0 %v258
        %855 = vmatpush.msra.mxu0 %v246
        %856 = vmatpush.msra.mxu0 %v234
        %857 = vmatmul.f32.gmra.mxu0 %v307
        %v858 = vpop.f32.mrf.mxu0
        %v859 = vadd.f32 %v286, %v858
        %860 = vmatmul.f32.gmra.mxu0 %v310
        %v861 = vpop.f32.mrf.mxu0
        %v862 = vadd.f32 %v286, %v861
        %863 = vmatmul.f32.gmra.mxu0 %v313
        %v864 = vpop.f32.mrf.mxu0
        %v865 = vadd.f32 %v286, %v864
        %866 = vmatmul.f32.gmra.mxu0 %v316
        %v867 = vpop.f32.mrf.mxu0
        %v868 = vadd.f32 %v286, %v867
        %869 = vmatmul.f32.gmra.mxu0 %v319
        %v870 = vpop.f32.mrf.mxu0
        %v871 = vadd.f32 %v286, %v870
        %872 = vmatmul.f32.gmra.mxu0 %v322
        %v873 = vpop.f32.mrf.mxu0
        %v874 = vadd.f32 %v286, %v873
        %875 = vmatmul.f32.gmra.mxu0 %v325
        %v876 = vpop.f32.mrf.mxu0
        %v877 = vadd.f32 %v286, %v876
        %878 = vmatmul.f32.gmra.mxu0 %v328
        %v879 = vpop.f32.mrf.mxu0
        %v880 = vadd.f32 %v286, %v879
        %881 = vmatmul.f32.gmra.mxu0 %v331
        %v882 = vpop.f32.mrf.mxu0
        %v883 = vadd.f32 %v286, %v882
        %884 = vmatmul.f32.gmra.mxu0 %v334
        %v885 = vpop.f32.mrf.mxu0
        %v886 = vadd.f32 %v286, %v885
        %887 = vmatmul.f32.gmra.mxu0 %v337
        %v888 = vpop.f32.mrf.mxu0
        %v889 = vadd.f32 %v286, %v888
        %890 = vmatmul.f32.gmra.mxu0 %v340
        %v891 = vpop.f32.mrf.mxu0
        %v892 = vadd.f32 %v286, %v891
        %893 = vmatmul.f32.gmra.mxu0 %v343
        %v894 = vpop.f32.mrf.mxu0
        %v895 = vadd.f32 %v286, %v894
        %896 = vmatmul.f32.gmra.mxu0 %v346
        %v897 = vpop.f32.mrf.mxu0
        %v898 = vadd.f32 %v286, %v897
        %899 = vmatmul.f32.gmra.mxu0 %v349
        %v900 = vpop.f32.mrf.mxu0
        %v901 = vadd.f32 %v286, %v900
        %902 = vmatmul.f32.gmra.mxu0 %v352
        %v903 = vpop.f32.mrf.mxu0
        %v904 = vadd.f32 %v286, %v903
        %905 = vmatmul.f32.gmra.mxu0 %v355
        %v906 = vpop.f32.mrf.mxu0
        %v907 = vadd.f32 %v286, %v906
        %908 = vmatmul.f32.gmra.mxu0 %v358
        %v909 = vpop.f32.mrf.mxu0
        %v910 = vadd.f32 %v286, %v909
        %911 = vmatmul.f32.gmra.mxu0 %v361
        %v912 = vpop.f32.mrf.mxu0
        %v913 = vadd.f32 %v286, %v912
        %914 = vmatmul.f32.gmra.mxu0 %v364
        %v915 = vpop.f32.mrf.mxu0
        %v916 = vadd.f32 %v286, %v915
        %917 = vmatmul.f32.gmra.mxu0 %v367
        %v918 = vpop.f32.mrf.mxu0
        %v919 = vadd.f32 %v286, %v918
        %920 = vmatmul.f32.gmra.mxu0 %v370
        %v921 = vpop.f32.mrf.mxu0
        %v922 = vadd.f32 %v286, %v921
        %923 = vmatmul.f32.gmra.mxu0 %v373
        %v924 = vpop.f32.mrf.mxu0
        %v925 = vadd.f32 %v286, %v924
        %926 = vmatmul.f32.gmra.mxu0 %v376
        %v927 = vpop.f32.mrf.mxu0
        %v928 = vadd.f32 %v286, %v927
        %929 = vmatmul.f32.gmra.mxu0 %v379
        %v930 = vpop.f32.mrf.mxu0
        %v931 = vadd.f32 %v286, %v930
        %932 = vdwg.mxu0
        %933 = vmatpush.msra.mxu0 0.0
        %934 = vmatpush.msra.mxu0 0.0
        %935 = vmatpush.msra.mxu0 0.0
        %936 = vmatpush.msra.mxu0 0.0
        %937 = vmatpush.msra.mxu0 0.0
        %938 = vmatpush.msra.mxu0 0.0
        %939 = vmatpush.msra.mxu0 0.0
        %940 = vmatpush.msra.mxu0 0.0
        %941 = vmatpush.msra.mxu0 0.0
        %942 = vmatpush.msra.mxu0 0.0
        %943 = vmatpush.msra.mxu0 0.0
        %944 = vmatpush.msra.mxu0 0.0
        %945 = vmatpush.msra.mxu0 %v271
        %946 = vmatpush.msra.mxu0 %v259
        %947 = vmatpush.msra.mxu0 %v247
        %948 = vmatpush.msra.mxu0 %v235
        %949 = vmatmul.f32.gmra.mxu0 %v307
        %v950 = vpop.f32.mrf.mxu0
        %v951 = vadd.f32 %v287, %v950
        %952 = vmatmul.f32.gmra.mxu0 %v310
        %v953 = vpop.f32.mrf.mxu0
        %v954 = vadd.f32 %v287, %v953
        %955 = vmatmul.f32.gmra.mxu0 %v313
        %v956 = vpop.f32.mrf.mxu0
        %v957 = vadd.f32 %v287, %v956
        %958 = vmatmul.f32.gmra.mxu0 %v316
        %v959 = vpop.f32.mrf.mxu0
        %v960 = vadd.f32 %v287, %v959
        %961 = vmatmul.f32.gmra.mxu0 %v319
        %v962 = vpop.f32.mrf.mxu0
        %v963 = vadd.f32 %v287, %v962
        %964 = vmatmul.f32.gmra.mxu0 %v322
        %v965 = vpop.f32.mrf.mxu0
        %v966 = vadd.f32 %v287, %v965
        %967 = vmatmul.f32.gmra.mxu0 %v325
        %v968 = vpop.f32.mrf.mxu0
        %v969 = vadd.f32 %v287, %v968
        %970 = vmatmul.f32.gmra.mxu0 %v328
        %v971 = vpop.f32.mrf.mxu0
        %v972 = vadd.f32 %v287, %v971
        %973 = vmatmul.f32.gmra.mxu0 %v331
        %v974 = vpop.f32.mrf.mxu0
        %v975 = vadd.f32 %v287, %v974
        %976 = vmatmul.f32.gmra.mxu0 %v334
        %v977 = vpop.f32.mrf.mxu0
        %v978 = vadd.f32 %v287, %v977
        %979 = vmatmul.f32.gmra.mxu0 %v337
        %v980 = vpop.f32.mrf.mxu0
        %v981 = vadd.f32 %v287, %v980
        %982 = vmatmul.f32.gmra.mxu0 %v340
        %v983 = vpop.f32.mrf.mxu0
        %v984 = vadd.f32 %v287, %v983
        %985 = vmatmul.f32.gmra.mxu0 %v343
        %v986 = vpop.f32.mrf.mxu0
        %v987 = vadd.f32 %v287, %v986
        %988 = vmatmul.f32.gmra.mxu0 %v346
        %v989 = vpop.f32.mrf.mxu0
        %v990 = vadd.f32 %v287, %v989
        %991 = vmatmul.f32.gmra.mxu0 %v349
        %v992 = vpop.f32.mrf.mxu0
        %v993 = vadd.f32 %v287, %v992
        %994 = vmatmul.f32.gmra.mxu0 %v352
        %v995 = vpop.f32.mrf.mxu0
        %v996 = vadd.f32 %v287, %v995
        %997 = vmatmul.f32.gmra.mxu0 %v355
        %v998 = vpop.f32.mrf.mxu0
        %v999 = vadd.f32 %v287, %v998
        %1000 = vmatmul.f32.gmra.mxu0 %v358
        %v1001 = vpop.f32.mrf.mxu0
        %v1002 = vadd.f32 %v287, %v1001
        %1003 = vmatmul.f32.gmra.mxu0 %v361
        %v1004 = vpop.f32.mrf.mxu0
        %v1005 = vadd.f32 %v287, %v1004
        %1006 = vmatmul.f32.gmra.mxu0 %v364
        %v1007 = vpop.f32.mrf.mxu0
        %v1008 = vadd.f32 %v287, %v1007
        %1009 = vmatmul.f32.gmra.mxu0 %v367
        %v1010 = vpop.f32.mrf.mxu0
        %v1011 = vadd.f32 %v287, %v1010
        %1012 = vmatmul.f32.gmra.mxu0 %v370
        %v1013 = vpop.f32.mrf.mxu0
        %v1014 = vadd.f32 %v287, %v1013
        %1015 = vmatmul.f32.gmra.mxu0 %v373
        %v1016 = vpop.f32.mrf.mxu0
        %v1017 = vadd.f32 %v287, %v1016
        %1018 = vmatmul.f32.gmra.mxu0 %v376
        %v1019 = vpop.f32.mrf.mxu0
        %v1020 = vadd.f32 %v287, %v1019
        %1021 = vmatmul.f32.gmra.mxu0 %v379
        %v1022 = vpop.f32.mrf.mxu0
        %v1023 = vadd.f32 %v287, %v1022
        %1024 = vdwg.mxu0
        %1025 = vmatpush.msra.mxu0 0.0
        %1026 = vmatpush.msra.mxu0 0.0
        %1027 = vmatpush.msra.mxu0 0.0
        %1028 = vmatpush.msra.mxu0 0.0
        %1029 = vmatpush.msra.mxu0 0.0
        %1030 = vmatpush.msra.mxu0 0.0
        %1031 = vmatpush.msra.mxu0 0.0
        %1032 = vmatpush.msra.mxu0 0.0
        %1033 = vmatpush.msra.mxu0 0.0
        %1034 = vmatpush.msra.mxu0 0.0
        %1035 = vmatpush.msra.mxu0 0.0
        %1036 = vmatpush.msra.mxu0 0.0
        %1037 = vmatpush.msra.mxu0 %v272
        %1038 = vmatpush.msra.mxu0 %v260
        %1039 = vmatpush.msra.mxu0 %v248
        %1040 = vmatpush.msra.mxu0 %v236
        %1041 = vmatmul.f32.gmra.mxu0 %v307
        %v1042 = vpop.f32.mrf.mxu0
        %v1043 = vadd.f32 %v288, %v1042
        %1044 = vmatmul.f32.gmra.mxu0 %v310
        %v1045 = vpop.f32.mrf.mxu0
        %v1046 = vadd.f32 %v288, %v1045
        %1047 = vmatmul.f32.gmra.mxu0 %v313
        %v1048 = vpop.f32.mrf.mxu0
        %v1049 = vadd.f32 %v288, %v1048
        %1050 = vmatmul.f32.gmra.mxu0 %v316
        %v1051 = vpop.f32.mrf.mxu0
        %v1052 = vadd.f32 %v288, %v1051
        %1053 = vmatmul.f32.gmra.mxu0 %v319
        %v1054 = vpop.f32.mrf.mxu0
        %v1055 = vadd.f32 %v288, %v1054
        %1056 = vmatmul.f32.gmra.mxu0 %v322
        %v1057 = vpop.f32.mrf.mxu0
        %v1058 = vadd.f32 %v288, %v1057
        %1059 = vmatmul.f32.gmra.mxu0 %v325
        %v1060 = vpop.f32.mrf.mxu0
        %v1061 = vadd.f32 %v288, %v1060
        %1062 = vmatmul.f32.gmra.mxu0 %v328
        %v1063 = vpop.f32.mrf.mxu0
        %v1064 = vadd.f32 %v288, %v1063
        %1065 = vmatmul.f32.gmra.mxu0 %v331
        %v1066 = vpop.f32.mrf.mxu0
        %v1067 = vadd.f32 %v288, %v1066
        %1068 = vmatmul.f32.gmra.mxu0 %v334
        %v1069 = vpop.f32.mrf.mxu0
        %v1070 = vadd.f32 %v288, %v1069
        %1071 = vmatmul.f32.gmra.mxu0 %v337
        %v1072 = vpop.f32.mrf.mxu0
        %v1073 = vadd.f32 %v288, %v1072
        %1074 = vmatmul.f32.gmra.mxu0 %v340
        %v1075 = vpop.f32.mrf.mxu0
        %v1076 = vadd.f32 %v288, %v1075
        %1077 = vmatmul.f32.gmra.mxu0 %v343
        %v1078 = vpop.f32.mrf.mxu0
        %v1079 = vadd.f32 %v288, %v1078
        %1080 = vmatmul.f32.gmra.mxu0 %v346
        %v1081 = vpop.f32.mrf.mxu0
        %v1082 = vadd.f32 %v288, %v1081
        %1083 = vmatmul.f32.gmra.mxu0 %v349
        %v1084 = vpop.f32.mrf.mxu0
        %v1085 = vadd.f32 %v288, %v1084
        %1086 = vmatmul.f32.gmra.mxu0 %v352
        %v1087 = vpop.f32.mrf.mxu0
        %v1088 = vadd.f32 %v288, %v1087
        %1089 = vmatmul.f32.gmra.mxu0 %v355
        %v1090 = vpop.f32.mrf.mxu0
        %v1091 = vadd.f32 %v288, %v1090
        %1092 = vmatmul.f32.gmra.mxu0 %v358
        %v1093 = vpop.f32.mrf.mxu0
        %v1094 = vadd.f32 %v288, %v1093
        %1095 = vmatmul.f32.gmra.mxu0 %v361
        %v1096 = vpop.f32.mrf.mxu0
        %v1097 = vadd.f32 %v288, %v1096
        %1098 = vmatmul.f32.gmra.mxu0 %v364
        %v1099 = vpop.f32.mrf.mxu0
        %v1100 = vadd.f32 %v288, %v1099
        %1101 = vmatmul.f32.gmra.mxu0 %v367
        %v1102 = vpop.f32.mrf.mxu0
        %v1103 = vadd.f32 %v288, %v1102
        %1104 = vmatmul.f32.gmra.mxu0 %v370
        %v1105 = vpop.f32.mrf.mxu0
        %v1106 = vadd.f32 %v288, %v1105
        %1107 = vmatmul.f32.gmra.mxu0 %v373
        %v1108 = vpop.f32.mrf.mxu0
        %v1109 = vadd.f32 %v288, %v1108
        %1110 = vmatmul.f32.gmra.mxu0 %v376
        %v1111 = vpop.f32.mrf.mxu0
        %v1112 = vadd.f32 %v288, %v1111
        %1113 = vmatmul.f32.gmra.mxu0 %v379
        %v1114 = vpop.f32.mrf.mxu0
        %v1115 = vadd.f32 %v288, %v1114
        %1116 = vdwg.mxu0
        %1117 = vmatpush.msra.mxu0 0.0
        %1118 = vmatpush.msra.mxu0 0.0
        %1119 = vmatpush.msra.mxu0 0.0
        %1120 = vmatpush.msra.mxu0 0.0
        %1121 = vmatpush.msra.mxu0 0.0
        %1122 = vmatpush.msra.mxu0 0.0
        %1123 = vmatpush.msra.mxu0 0.0
        %1124 = vmatpush.msra.mxu0 0.0
        %1125 = vmatpush.msra.mxu0 0.0
        %1126 = vmatpush.msra.mxu0 0.0
        %1127 = vmatpush.msra.mxu0 0.0
        %1128 = vmatpush.msra.mxu0 0.0
        %1129 = vmatpush.msra.mxu0 %v273
        %1130 = vmatpush.msra.mxu0 %v261
        %1131 = vmatpush.msra.mxu0 %v249
        %1132 = vmatpush.msra.mxu0 %v237
        %1133 = vmatmul.f32.gmra.mxu0 %v307
        %v1134 = vpop.f32.mrf.mxu0
        %v1135 = vadd.f32 %v289, %v1134
        %1136 = vmatmul.f32.gmra.mxu0 %v310
        %v1137 = vpop.f32.mrf.mxu0
        %v1138 = vadd.f32 %v289, %v1137
        %1139 = vmatmul.f32.gmra.mxu0 %v313
        %v1140 = vpop.f32.mrf.mxu0
        %v1141 = vadd.f32 %v289, %v1140
        %1142 = vmatmul.f32.gmra.mxu0 %v316
        %v1143 = vpop.f32.mrf.mxu0
        %v1144 = vadd.f32 %v289, %v1143
        %1145 = vmatmul.f32.gmra.mxu0 %v319
        %v1146 = vpop.f32.mrf.mxu0
        %v1147 = vadd.f32 %v289, %v1146
        %1148 = vmatmul.f32.gmra.mxu0 %v322
        %v1149 = vpop.f32.mrf.mxu0
        %v1150 = vadd.f32 %v289, %v1149
        %1151 = vmatmul.f32.gmra.mxu0 %v325
        %v1152 = vpop.f32.mrf.mxu0
        %v1153 = vadd.f32 %v289, %v1152
        %1154 = vmatmul.f32.gmra.mxu0 %v328
        %v1155 = vpop.f32.mrf.mxu0
        %v1156 = vadd.f32 %v289, %v1155
        %1157 = vmatmul.f32.gmra.mxu0 %v331
        %v1158 = vpop.f32.mrf.mxu0
        %v1159 = vadd.f32 %v289, %v1158
        %1160 = vmatmul.f32.gmra.mxu0 %v334
        %v1161 = vpop.f32.mrf.mxu0
        %v1162 = vadd.f32 %v289, %v1161
        %1163 = vmatmul.f32.gmra.mxu0 %v337
        %v1164 = vpop.f32.mrf.mxu0
        %v1165 = vadd.f32 %v289, %v1164
        %1166 = vmatmul.f32.gmra.mxu0 %v340
        %v1167 = vpop.f32.mrf.mxu0
        %v1168 = vadd.f32 %v289, %v1167
        %1169 = vmatmul.f32.gmra.mxu0 %v343
        %v1170 = vpop.f32.mrf.mxu0
        %v1171 = vadd.f32 %v289, %v1170
        %1172 = vmatmul.f32.gmra.mxu0 %v346
        %v1173 = vpop.f32.mrf.mxu0
        %v1174 = vadd.f32 %v289, %v1173
        %1175 = vmatmul.f32.gmra.mxu0 %v349
        %v1176 = vpop.f32.mrf.mxu0
        %v1177 = vadd.f32 %v289, %v1176
        %1178 = vmatmul.f32.gmra.mxu0 %v352
        %v1179 = vpop.f32.mrf.mxu0
        %v1180 = vadd.f32 %v289, %v1179
        %1181 = vmatmul.f32.gmra.mxu0 %v355
        %v1182 = vpop.f32.mrf.mxu0
        %v1183 = vadd.f32 %v289, %v1182
        %1184 = vmatmul.f32.gmra.mxu0 %v358
        %v1185 = vpop.f32.mrf.mxu0
        %v1186 = vadd.f32 %v289, %v1185
        %1187 = vmatmul.f32.gmra.mxu0 %v361
        %v1188 = vpop.f32.mrf.mxu0
        %v1189 = vadd.f32 %v289, %v1188
        %1190 = vmatmul.f32.gmra.mxu0 %v364
        %v1191 = vpop.f32.mrf.mxu0
        %v1192 = vadd.f32 %v289, %v1191
        %1193 = vmatmul.f32.gmra.mxu0 %v367
        %v1194 = vpop.f32.mrf.mxu0
        %v1195 = vadd.f32 %v289, %v1194
        %1196 = vmatmul.f32.gmra.mxu0 %v370
        %v1197 = vpop.f32.mrf.mxu0
        %v1198 = vadd.f32 %v289, %v1197
        %1199 = vmatmul.f32.gmra.mxu0 %v373
        %v1200 = vpop.f32.mrf.mxu0
        %v1201 = vadd.f32 %v289, %v1200
        %1202 = vmatmul.f32.gmra.mxu0 %v376
        %v1203 = vpop.f32.mrf.mxu0
        %v1204 = vadd.f32 %v289, %v1203
        %1205 = vmatmul.f32.gmra.mxu0 %v379
        %v1206 = vpop.f32.mrf.mxu0
        %v1207 = vadd.f32 %v289, %v1206
        %1208 = vdwg.mxu0
        %1209 = vmatpush.msra.mxu0 0.0
        %1210 = vmatpush.msra.mxu0 0.0
        %1211 = vmatpush.msra.mxu0 0.0
        %1212 = vmatpush.msra.mxu0 0.0
        %1213 = vmatpush.msra.mxu0 0.0
        %1214 = vmatpush.msra.mxu0 0.0
        %1215 = vmatpush.msra.mxu0 0.0
        %1216 = vmatpush.msra.mxu0 0.0
        %1217 = vmatpush.msra.mxu0 0.0
        %1218 = vmatpush.msra.mxu0 0.0
        %1219 = vmatpush.msra.mxu0 0.0
        %1220 = vmatpush.msra.mxu0 0.0
        %1221 = vmatpush.msra.mxu0 %v274
        %1222 = vmatpush.msra.mxu0 %v262
        %1223 = vmatpush.msra.mxu0 %v250
        %1224 = vmatpush.msra.mxu0 %v238
        %1225 = vmatmul.f32.gmra.mxu0 %v307
        %v1226 = vpop.f32.mrf.mxu0
        %v1227 = vadd.f32 %v290, %v1226
        %1228 = vmatmul.f32.gmra.mxu0 %v310
        %v1229 = vpop.f32.mrf.mxu0
        %v1230 = vadd.f32 %v290, %v1229
        %1231 = vmatmul.f32.gmra.mxu0 %v313
        %v1232 = vpop.f32.mrf.mxu0
        %v1233 = vadd.f32 %v290, %v1232
        %1234 = vmatmul.f32.gmra.mxu0 %v316
        %v1235 = vpop.f32.mrf.mxu0
        %v1236 = vadd.f32 %v290, %v1235
        %1237 = vmatmul.f32.gmra.mxu0 %v319
        %v1238 = vpop.f32.mrf.mxu0
        %v1239 = vadd.f32 %v290, %v1238
        %1240 = vmatmul.f32.gmra.mxu0 %v322
        %v1241 = vpop.f32.mrf.mxu0
        %v1242 = vadd.f32 %v290, %v1241
        %1243 = vmatmul.f32.gmra.mxu0 %v325
        %v1244 = vpop.f32.mrf.mxu0
        %v1245 = vadd.f32 %v290, %v1244
        %1246 = vmatmul.f32.gmra.mxu0 %v328
        %v1247 = vpop.f32.mrf.mxu0
        %v1248 = vadd.f32 %v290, %v1247
        %1249 = vmatmul.f32.gmra.mxu0 %v331
        %v1250 = vpop.f32.mrf.mxu0
        %v1251 = vadd.f32 %v290, %v1250
        %1252 = vmatmul.f32.gmra.mxu0 %v334
        %v1253 = vpop.f32.mrf.mxu0
        %v1254 = vadd.f32 %v290, %v1253
        %1255 = vmatmul.f32.gmra.mxu0 %v337
        %v1256 = vpop.f32.mrf.mxu0
        %v1257 = vadd.f32 %v290, %v1256
        %1258 = vmatmul.f32.gmra.mxu0 %v340
        %v1259 = vpop.f32.mrf.mxu0
        %v1260 = vadd.f32 %v290, %v1259
        %1261 = vmatmul.f32.gmra.mxu0 %v343
        %v1262 = vpop.f32.mrf.mxu0
        %v1263 = vadd.f32 %v290, %v1262
        %1264 = vmatmul.f32.gmra.mxu0 %v346
        %v1265 = vpop.f32.mrf.mxu0
        %v1266 = vadd.f32 %v290, %v1265
        %1267 = vmatmul.f32.gmra.mxu0 %v349
        %v1268 = vpop.f32.mrf.mxu0
        %v1269 = vadd.f32 %v290, %v1268
        %1270 = vmatmul.f32.gmra.mxu0 %v352
        %v1271 = vpop.f32.mrf.mxu0
        %v1272 = vadd.f32 %v290, %v1271
        %1273 = vmatmul.f32.gmra.mxu0 %v355
        %v1274 = vpop.f32.mrf.mxu0
        %v1275 = vadd.f32 %v290, %v1274
        %1276 = vmatmul.f32.gmra.mxu0 %v358
        %v1277 = vpop.f32.mrf.mxu0
        %v1278 = vadd.f32 %v290, %v1277
        %1279 = vmatmul.f32.gmra.mxu0 %v361
        %v1280 = vpop.f32.mrf.mxu0
        %v1281 = vadd.f32 %v290, %v1280
        %1282 = vmatmul.f32.gmra.mxu0 %v364
        %v1283 = vpop.f32.mrf.mxu0
        %v1284 = vadd.f32 %v290, %v1283
        %1285 = vmatmul.f32.gmra.mxu0 %v367
        %v1286 = vpop.f32.mrf.mxu0
        %v1287 = vadd.f32 %v290, %v1286
        %1288 = vmatmul.f32.gmra.mxu0 %v370
        %v1289 = vpop.f32.mrf.mxu0
        %v1290 = vadd.f32 %v290, %v1289
        %1291 = vmatmul.f32.gmra.mxu0 %v373
        %v1292 = vpop.f32.mrf.mxu0
        %v1293 = vadd.f32 %v290, %v1292
        %1294 = vmatmul.f32.gmra.mxu0 %v376
        %v1295 = vpop.f32.mrf.mxu0
        %v1296 = vadd.f32 %v290, %v1295
        %1297 = vmatmul.f32.gmra.mxu0 %v379
        %v1298 = vpop.f32.mrf.mxu0
        %v1299 = vadd.f32 %v290, %v1298
        %1300 = vdwg.mxu0
        %1301 = vmatpush.msra.mxu0 0.0
        %1302 = vmatpush.msra.mxu0 0.0
        %1303 = vmatpush.msra.mxu0 0.0
        %1304 = vmatpush.msra.mxu0 0.0
        %1305 = vmatpush.msra.mxu0 0.0
        %1306 = vmatpush.msra.mxu0 0.0
        %1307 = vmatpush.msra.mxu0 0.0
        %1308 = vmatpush.msra.mxu0 0.0
        %1309 = vmatpush.msra.mxu0 0.0
        %1310 = vmatpush.msra.mxu0 0.0
        %1311 = vmatpush.msra.mxu0 0.0
        %1312 = vmatpush.msra.mxu0 0.0
        %1313 = vmatpush.msra.mxu0 %v275
        %1314 = vmatpush.msra.mxu0 %v263
        %1315 = vmatpush.msra.mxu0 %v251
        %1316 = vmatpush.msra.mxu0 %v239
        %1317 = vmatmul.f32.gmra.mxu0 %v307
        %v1318 = vpop.f32.mrf.mxu0
        %v1319 = vadd.f32 %v291, %v1318
        %1320 = vmatmul.f32.gmra.mxu0 %v310
        %v1321 = vpop.f32.mrf.mxu0
        %v1322 = vadd.f32 %v291, %v1321
        %1323 = vmatmul.f32.gmra.mxu0 %v313
        %v1324 = vpop.f32.mrf.mxu0
        %v1325 = vadd.f32 %v291, %v1324
        %1326 = vmatmul.f32.gmra.mxu0 %v316
        %v1327 = vpop.f32.mrf.mxu0
        %v1328 = vadd.f32 %v291, %v1327
        %1329 = vmatmul.f32.gmra.mxu0 %v319
        %v1330 = vpop.f32.mrf.mxu0
        %v1331 = vadd.f32 %v291, %v1330
        %1332 = vmatmul.f32.gmra.mxu0 %v322
        %v1333 = vpop.f32.mrf.mxu0
        %v1334 = vadd.f32 %v291, %v1333
        %1335 = vmatmul.f32.gmra.mxu0 %v325
        %v1336 = vpop.f32.mrf.mxu0
        %v1337 = vadd.f32 %v291, %v1336
        %1338 = vmatmul.f32.gmra.mxu0 %v328
        %v1339 = vpop.f32.mrf.mxu0
        %v1340 = vadd.f32 %v291, %v1339
        %1341 = vmatmul.f32.gmra.mxu0 %v331
        %v1342 = vpop.f32.mrf.mxu0
        %v1343 = vadd.f32 %v291, %v1342
        %1344 = vmatmul.f32.gmra.mxu0 %v334
        %v1345 = vpop.f32.mrf.mxu0
        %v1346 = vadd.f32 %v291, %v1345
        %1347 = vmatmul.f32.gmra.mxu0 %v337
        %v1348 = vpop.f32.mrf.mxu0
        %v1349 = vadd.f32 %v291, %v1348
        %1350 = vmatmul.f32.gmra.mxu0 %v340
        %v1351 = vpop.f32.mrf.mxu0
        %v1352 = vadd.f32 %v291, %v1351
        %1353 = vmatmul.f32.gmra.mxu0 %v343
        %v1354 = vpop.f32.mrf.mxu0
        %v1355 = vadd.f32 %v291, %v1354
        %1356 = vmatmul.f32.gmra.mxu0 %v346
        %v1357 = vpop.f32.mrf.mxu0
        %v1358 = vadd.f32 %v291, %v1357
        %1359 = vmatmul.f32.gmra.mxu0 %v349
        %v1360 = vpop.f32.mrf.mxu0
        %v1361 = vadd.f32 %v291, %v1360
        %1362 = vmatmul.f32.gmra.mxu0 %v352
        %v1363 = vpop.f32.mrf.mxu0
        %v1364 = vadd.f32 %v291, %v1363
        %1365 = vmatmul.f32.gmra.mxu0 %v355
        %v1366 = vpop.f32.mrf.mxu0
        %v1367 = vadd.f32 %v291, %v1366
        %1368 = vmatmul.f32.gmra.mxu0 %v358
        %v1369 = vpop.f32.mrf.mxu0
        %v1370 = vadd.f32 %v291, %v1369
        %1371 = vmatmul.f32.gmra.mxu0 %v361
        %v1372 = vpop.f32.mrf.mxu0
        %v1373 = vadd.f32 %v291, %v1372
        %1374 = vmatmul.f32.gmra.mxu0 %v364
        %v1375 = vpop.f32.mrf.mxu0
        %v1376 = vadd.f32 %v291, %v1375
        %1377 = vmatmul.f32.gmra.mxu0 %v367
        %v1378 = vpop.f32.mrf.mxu0
        %v1379 = vadd.f32 %v291, %v1378
        %1380 = vmatmul.f32.gmra.mxu0 %v370
        %v1381 = vpop.f32.mrf.mxu0
        %v1382 = vadd.f32 %v291, %v1381
        %1383 = vmatmul.f32.gmra.mxu0 %v373
        %v1384 = vpop.f32.mrf.mxu0
        %v1385 = vadd.f32 %v291, %v1384
        %1386 = vmatmul.f32.gmra.mxu0 %v376
        %v1387 = vpop.f32.mrf.mxu0
        %v1388 = vadd.f32 %v291, %v1387
        %1389 = vmatmul.f32.gmra.mxu0 %v379
        %v1390 = vpop.f32.mrf.mxu0
        %v1391 = vadd.f32 %v291, %v1390
        %1392 = vdwg.mxu0
        %1393 = vmatpush.msra.mxu0 0.0
        %1394 = vmatpush.msra.mxu0 0.0
        %1395 = vmatpush.msra.mxu0 0.0
        %1396 = vmatpush.msra.mxu0 0.0
        %1397 = vmatpush.msra.mxu0 0.0
        %1398 = vmatpush.msra.mxu0 0.0
        %1399 = vmatpush.msra.mxu0 0.0
        %1400 = vmatpush.msra.mxu0 0.0
        %1401 = vmatpush.msra.mxu0 0.0
        %1402 = vmatpush.msra.mxu0 0.0
        %1403 = vmatpush.msra.mxu0 0.0
        %1404 = vmatpush.msra.mxu0 0.0
        %1405 = vmatpush.msra.mxu0 %v276
        %1406 = vmatpush.msra.mxu0 %v264
        %1407 = vmatpush.msra.mxu0 %v252
        %1408 = vmatpush.msra.mxu0 %v240
        %1409 = vmatmul.f32.gmra.mxu0 %v307
        %v1410 = vpop.f32.mrf.mxu0
        %v1411 = vadd.f32 %v292, %v1410
        %1412 = vmatmul.f32.gmra.mxu0 %v310
        %v1413 = vpop.f32.mrf.mxu0
        %v1414 = vadd.f32 %v292, %v1413
        %1415 = vmatmul.f32.gmra.mxu0 %v313
        %v1416 = vpop.f32.mrf.mxu0
        %v1417 = vadd.f32 %v292, %v1416
        %1418 = vmatmul.f32.gmra.mxu0 %v316
        %v1419 = vpop.f32.mrf.mxu0
        %v1420 = vadd.f32 %v292, %v1419
        %1421 = vmatmul.f32.gmra.mxu0 %v319
        %v1422 = vpop.f32.mrf.mxu0
        %v1423 = vadd.f32 %v292, %v1422
        %1424 = vmatmul.f32.gmra.mxu0 %v322
        %v1425 = vpop.f32.mrf.mxu0
        %v1426 = vadd.f32 %v292, %v1425
        %1427 = vmatmul.f32.gmra.mxu0 %v325
        %v1428 = vpop.f32.mrf.mxu0
        %v1429 = vadd.f32 %v292, %v1428
        %1430 = vmatmul.f32.gmra.mxu0 %v328
        %v1431 = vpop.f32.mrf.mxu0
        %v1432 = vadd.f32 %v292, %v1431
        %1433 = vmatmul.f32.gmra.mxu0 %v331
        %v1434 = vpop.f32.mrf.mxu0
        %v1435 = vadd.f32 %v292, %v1434
        %1436 = vmatmul.f32.gmra.mxu0 %v334
        %v1437 = vpop.f32.mrf.mxu0
        %v1438 = vadd.f32 %v292, %v1437
        %1439 = vmatmul.f32.gmra.mxu0 %v337
        %v1440 = vpop.f32.mrf.mxu0
        %v1441 = vadd.f32 %v292, %v1440
        %1442 = vmatmul.f32.gmra.mxu0 %v340
        %v1443 = vpop.f32.mrf.mxu0
        %v1444 = vadd.f32 %v292, %v1443
        %1445 = vmatmul.f32.gmra.mxu0 %v343
        %v1446 = vpop.f32.mrf.mxu0
        %v1447 = vadd.f32 %v292, %v1446
        %1448 = vmatmul.f32.gmra.mxu0 %v346
        %v1449 = vpop.f32.mrf.mxu0
        %v1450 = vadd.f32 %v292, %v1449
        %1451 = vmatmul.f32.gmra.mxu0 %v349
        %v1452 = vpop.f32.mrf.mxu0
        %v1453 = vadd.f32 %v292, %v1452
        %1454 = vmatmul.f32.gmra.mxu0 %v352
        %v1455 = vpop.f32.mrf.mxu0
        %v1456 = vadd.f32 %v292, %v1455
        %1457 = vmatmul.f32.gmra.mxu0 %v355
        %v1458 = vpop.f32.mrf.mxu0
        %v1459 = vadd.f32 %v292, %v1458
        %1460 = vmatmul.f32.gmra.mxu0 %v358
        %v1461 = vpop.f32.mrf.mxu0
        %v1462 = vadd.f32 %v292, %v1461
        %1463 = vmatmul.f32.gmra.mxu0 %v361
        %v1464 = vpop.f32.mrf.mxu0
        %v1465 = vadd.f32 %v292, %v1464
        %1466 = vmatmul.f32.gmra.mxu0 %v364
        %v1467 = vpop.f32.mrf.mxu0
        %v1468 = vadd.f32 %v292, %v1467
        %1469 = vmatmul.f32.gmra.mxu0 %v367
        %v1470 = vpop.f32.mrf.mxu0
        %v1471 = vadd.f32 %v292, %v1470
        %1472 = vmatmul.f32.gmra.mxu0 %v370
        %v1473 = vpop.f32.mrf.mxu0
        %v1474 = vadd.f32 %v292, %v1473
        %1475 = vmatmul.f32.gmra.mxu0 %v373
        %v1476 = vpop.f32.mrf.mxu0
        %v1477 = vadd.f32 %v292, %v1476
        %1478 = vmatmul.f32.gmra.mxu0 %v376
        %v1479 = vpop.f32.mrf.mxu0
        %v1480 = vadd.f32 %v292, %v1479
        %1481 = vmatmul.f32.gmra.mxu0 %v379
        %v1482 = vpop.f32.mrf.mxu0
        %v1483 = vadd.f32 %v292, %v1482
        %1484 = vdwg.mxu0
        %1485 = vst [vmem:[%s196] sm:$0xff] %v399
        %1486 = vst [vmem:[%s196 + $0x8] sm:$0xff] %v491
        %1487 = vst [vmem:[%s196 + $0x10] sm:$0xff] %v583
        %1488 = vst [vmem:[%s196 + $0x18] sm:$0xff] %v675
        %1489 = vst [vmem:[%s196 + $0x20] sm:$0xff] %v767
        %1490 = vst [vmem:[%s196 + $0x28] sm:$0xff] %v859
        %1491 = vst [vmem:[%s196 + $0x30] sm:$0xff] %v951
        %1492 = vst [vmem:[%s196 + $0x38] sm:$0xff] %v1043
        %1493 = vst [vmem:[%s196 + $0x40] sm:$0xff] %v1135
        %1494 = vst [vmem:[%s196 + $0x48] sm:$0xff] %v1227
        %1495 = vst [vmem:[%s196 + $0x50] sm:$0xff] %v1319
        %vm1496 = vcmask 211968
        %1497 = vst.msk [vmem:[%s196 + $0x58] sm:$0xff] %vm1496, %v1411
        %1498 = vst [vmem:[%s196 + $0x60] sm:$0xff] %v402
        %1499 = vst [vmem:[%s196 + $0x68] sm:$0xff] %v494
        %1500 = vst [vmem:[%s196 + $0x70] sm:$0xff] %v586
        %1501 = vst [vmem:[%s196 + $0x78] sm:$0xff] %v678
        %1502 = vst [vmem:[%s196 + $0x80] sm:$0xff] %v770
        %1503 = vst [vmem:[%s196 + $0x88] sm:$0xff] %v862
        %1504 = vst [vmem:[%s196 + $0x90] sm:$0xff] %v954
        %1505 = vst [vmem:[%s196 + $0x98] sm:$0xff] %v1046
        %1506 = vst [vmem:[%s196 + $0xa0] sm:$0xff] %v1138
        %1507 = vst [vmem:[%s196 + $0xa8] sm:$0xff] %v1230
        %1508 = vst [vmem:[%s196 + $0xb0] sm:$0xff] %v1322
        %1509 = vst.msk [vmem:[%s196 + $0xb8] sm:$0xff] %vm1496, %v1414
        %1510 = vst [vmem:[%s196 + $0xc0] sm:$0xff] %v405
        %1511 = vst [vmem:[%s196 + $0xc8] sm:$0xff] %v497
        %1512 = vst [vmem:[%s196 + $0xd0] sm:$0xff] %v589
        %1513 = vst [vmem:[%s196 + $0xd8] sm:$0xff] %v681
        %1514 = vst [vmem:[%s196 + $0xe0] sm:$0xff] %v773
        %1515 = vst [vmem:[%s196 + $0xe8] sm:$0xff] %v865
        %1516 = vst [vmem:[%s196 + $0xf0] sm:$0xff] %v957
        %1517 = vst [vmem:[%s196 + $0xf8] sm:$0xff] %v1049
        %1518 = vst [vmem:[%s196 + $0x100] sm:$0xff] %v1141
        %1519 = vst [vmem:[%s196 + $0x108] sm:$0xff] %v1233
        %1520 = vst [vmem:[%s196 + $0x110] sm:$0xff] %v1325
        %1521 = vst.msk [vmem:[%s196 + $0x118] sm:$0xff] %vm1496, %v1417
        %1522 = vst [vmem:[%s196 + $0x120] sm:$0xff] %v408
        %1523 = vst [vmem:[%s196 + $0x128] sm:$0xff] %v500
        %1524 = vst [vmem:[%s196 + $0x130] sm:$0xff] %v592
        %1525 = vst [vmem:[%s196 + $0x138] sm:$0xff] %v684
        %1526 = vst [vmem:[%s196 + $0x140] sm:$0xff] %v776
        %1527 = vst [vmem:[%s196 + $0x148] sm:$0xff] %v868
        %1528 = vst [vmem:[%s196 + $0x150] sm:$0xff] %v960
        %1529 = vst [vmem:[%s196 + $0x158] sm:$0xff] %v1052
        %1530 = vst [vmem:[%s196 + $0x160] sm:$0xff] %v1144
        %1531 = vst [vmem:[%s196 + $0x168] sm:$0xff] %v1236
        %1532 = vst [vmem:[%s196 + $0x170] sm:$0xff] %v1328
        %1533 = vst.msk [vmem:[%s196 + $0x178] sm:$0xff] %vm1496, %v1420
        %1534 = vst [vmem:[%s196 + $0x180] sm:$0xff] %v411
        %1535 = vst [vmem:[%s196 + $0x188] sm:$0xff] %v503
        %1536 = vst [vmem:[%s196 + $0x190] sm:$0xff] %v595
        %1537 = vst [vmem:[%s196 + $0x198] sm:$0xff] %v687
        %1538 = vst [vmem:[%s196 + $0x1a0] sm:$0xff] %v779
        %1539 = vst [vmem:[%s196 + $0x1a8] sm:$0xff] %v871
        %1540 = vst [vmem:[%s196 + $0x1b0] sm:$0xff] %v963
        %1541 = vst [vmem:[%s196 + $0x1b8] sm:$0xff] %v1055
        %1542 = vst [vmem:[%s196 + $0x1c0] sm:$0xff] %v1147
        %1543 = vst [vmem:[%s196 + $0x1c8] sm:$0xff] %v1239
        %1544 = vst [vmem:[%s196 + $0x1d0] sm:$0xff] %v1331
        %1545 = vst.msk [vmem:[%s196 + $0x1d8] sm:$0xff] %vm1496, %v1423
        %1546 = vst [vmem:[%s196 + $0x1e0] sm:$0xff] %v414
        %1547 = vst [vmem:[%s196 + $0x1e8] sm:$0xff] %v506
        %1548 = vst [vmem:[%s196 + $0x1f0] sm:$0xff] %v598
        %1549 = vst [vmem:[%s196 + $0x1f8] sm:$0xff] %v690
        %1550 = vst [vmem:[%s196 + $0x200] sm:$0xff] %v782
        %1551 = vst [vmem:[%s196 + $0x208] sm:$0xff] %v874
        %1552 = vst [vmem:[%s196 + $0x210] sm:$0xff] %v966
        %1553 = vst [vmem:[%s196 + $0x218] sm:$0xff] %v1058
        %1554 = vst [vmem:[%s196 + $0x220] sm:$0xff] %v1150
        %1555 = vst [vmem:[%s196 + $0x228] sm:$0xff] %v1242
        %1556 = vst [vmem:[%s196 + $0x230] sm:$0xff] %v1334
        %1557 = vst.msk [vmem:[%s196 + $0x238] sm:$0xff] %vm1496, %v1426
        %1558 = vst [vmem:[%s196 + $0x240] sm:$0xff] %v417
        %1559 = vst [vmem:[%s196 + $0x248] sm:$0xff] %v509
        %1560 = vst [vmem:[%s196 + $0x250] sm:$0xff] %v601
        %1561 = vst [vmem:[%s196 + $0x258] sm:$0xff] %v693
        %1562 = vst [vmem:[%s196 + $0x260] sm:$0xff] %v785
        %1563 = vst [vmem:[%s196 + $0x268] sm:$0xff] %v877
        %1564 = vst [vmem:[%s196 + $0x270] sm:$0xff] %v969
        %1565 = vst [vmem:[%s196 + $0x278] sm:$0xff] %v1061
        %1566 = vst [vmem:[%s196 + $0x280] sm:$0xff] %v1153
        %1567 = vst [vmem:[%s196 + $0x288] sm:$0xff] %v1245
        %1568 = vst [vmem:[%s196 + $0x290] sm:$0xff] %v1337
        %1569 = vst.msk [vmem:[%s196 + $0x298] sm:$0xff] %vm1496, %v1429
        %1570 = vst [vmem:[%s196 + $0x2a0] sm:$0xff] %v420
        %1571 = vst [vmem:[%s196 + $0x2a8] sm:$0xff] %v512
        %1572 = vst [vmem:[%s196 + $0x2b0] sm:$0xff] %v604
        %1573 = vst [vmem:[%s196 + $0x2b8] sm:$0xff] %v696
        %1574 = vst [vmem:[%s196 + $0x2c0] sm:$0xff] %v788
        %1575 = vst [vmem:[%s196 + $0x2c8] sm:$0xff] %v880
        %1576 = vst [vmem:[%s196 + $0x2d0] sm:$0xff] %v972
        %1577 = vst [vmem:[%s196 + $0x2d8] sm:$0xff] %v1064
        %1578 = vst [vmem:[%s196 + $0x2e0] sm:$0xff] %v1156
        %1579 = vst [vmem:[%s196 + $0x2e8] sm:$0xff] %v1248
        %1580 = vst [vmem:[%s196 + $0x2f0] sm:$0xff] %v1340
        %1581 = vst.msk [vmem:[%s196 + $0x2f8] sm:$0xff] %vm1496, %v1432
        %1582 = vst [vmem:[%s196 + $0x300] sm:$0xff] %v423
        %1583 = vst [vmem:[%s196 + $0x308] sm:$0xff] %v515
        %1584 = vst [vmem:[%s196 + $0x310] sm:$0xff] %v607
        %1585 = vst [vmem:[%s196 + $0x318] sm:$0xff] %v699
        %1586 = vst [vmem:[%s196 + $0x320] sm:$0xff] %v791
        %1587 = vst [vmem:[%s196 + $0x328] sm:$0xff] %v883
        %1588 = vst [vmem:[%s196 + $0x330] sm:$0xff] %v975
        %1589 = vst [vmem:[%s196 + $0x338] sm:$0xff] %v1067
        %1590 = vst [vmem:[%s196 + $0x340] sm:$0xff] %v1159
        %1591 = vst [vmem:[%s196 + $0x348] sm:$0xff] %v1251
        %1592 = vst [vmem:[%s196 + $0x350] sm:$0xff] %v1343
        %1593 = vst.msk [vmem:[%s196 + $0x358] sm:$0xff] %vm1496, %v1435
        %1594 = vst [vmem:[%s196 + $0x360] sm:$0xff] %v426
        %1595 = vst [vmem:[%s196 + $0x368] sm:$0xff] %v518
        %1596 = vst [vmem:[%s196 + $0x370] sm:$0xff] %v610
        %1597 = vst [vmem:[%s196 + $0x378] sm:$0xff] %v702
        %1598 = vst [vmem:[%s196 + $0x380] sm:$0xff] %v794
        %1599 = vst [vmem:[%s196 + $0x388] sm:$0xff] %v886
        %1600 = vst [vmem:[%s196 + $0x390] sm:$0xff] %v978
        %1601 = vst [vmem:[%s196 + $0x398] sm:$0xff] %v1070
        %1602 = vst [vmem:[%s196 + $0x3a0] sm:$0xff] %v1162
        %1603 = vst [vmem:[%s196 + $0x3a8] sm:$0xff] %v1254
        %1604 = vst [vmem:[%s196 + $0x3b0] sm:$0xff] %v1346
        %1605 = vst.msk [vmem:[%s196 + $0x3b8] sm:$0xff] %vm1496, %v1438
        %1606 = vst [vmem:[%s196 + $0x3c0] sm:$0xff] %v429
        %1607 = vst [vmem:[%s196 + $0x3c8] sm:$0xff] %v521
        %1608 = vst [vmem:[%s196 + $0x3d0] sm:$0xff] %v613
        %1609 = vst [vmem:[%s196 + $0x3d8] sm:$0xff] %v705
        %1610 = vst [vmem:[%s196 + $0x3e0] sm:$0xff] %v797
        %1611 = vst [vmem:[%s196 + $0x3e8] sm:$0xff] %v889
        %1612 = vst [vmem:[%s196 + $0x3f0] sm:$0xff] %v981
        %1613 = vst [vmem:[%s196 + $0x3f8] sm:$0xff] %v1073
        %1614 = vst [vmem:[%s196 + $0x400] sm:$0xff] %v1165
        %1615 = vst [vmem:[%s196 + $0x408] sm:$0xff] %v1257
        %1616 = vst [vmem:[%s196 + $0x410] sm:$0xff] %v1349
        %1617 = vst.msk [vmem:[%s196 + $0x418] sm:$0xff] %vm1496, %v1441
        %1618 = vst [vmem:[%s196 + $0x420] sm:$0xff] %v432
        %1619 = vst [vmem:[%s196 + $0x428] sm:$0xff] %v524
        %1620 = vst [vmem:[%s196 + $0x430] sm:$0xff] %v616
        %1621 = vst [vmem:[%s196 + $0x438] sm:$0xff] %v708
        %1622 = vst [vmem:[%s196 + $0x440] sm:$0xff] %v800
        %1623 = vst [vmem:[%s196 + $0x448] sm:$0xff] %v892
        %1624 = vst [vmem:[%s196 + $0x450] sm:$0xff] %v984
        %1625 = vst [vmem:[%s196 + $0x458] sm:$0xff] %v1076
        %1626 = vst [vmem:[%s196 + $0x460] sm:$0xff] %v1168
        %1627 = vst [vmem:[%s196 + $0x468] sm:$0xff] %v1260
        %1628 = vst [vmem:[%s196 + $0x470] sm:$0xff] %v1352
        %1629 = vst.msk [vmem:[%s196 + $0x478] sm:$0xff] %vm1496, %v1444
        %1630 = vst [vmem:[%s196 + $0x480] sm:$0xff] %v435
        %1631 = vst [vmem:[%s196 + $0x488] sm:$0xff] %v527
        %1632 = vst [vmem:[%s196 + $0x490] sm:$0xff] %v619
        %1633 = vst [vmem:[%s196 + $0x498] sm:$0xff] %v711
        %1634 = vst [vmem:[%s196 + $0x4a0] sm:$0xff] %v803
        %1635 = vst [vmem:[%s196 + $0x4a8] sm:$0xff] %v895
        %1636 = vst [vmem:[%s196 + $0x4b0] sm:$0xff] %v987
        %1637 = vst [vmem:[%s196 + $0x4b8] sm:$0xff] %v1079
        %1638 = vst [vmem:[%s196 + $0x4c0] sm:$0xff] %v1171
        %1639 = vst [vmem:[%s196 + $0x4c8] sm:$0xff] %v1263
        %1640 = vst [vmem:[%s196 + $0x4d0] sm:$0xff] %v1355
        %1641 = vst.msk [vmem:[%s196 + $0x4d8] sm:$0xff] %vm1496, %v1447
        %1642 = vst [vmem:[%s196 + $0x4e0] sm:$0xff] %v438
        %1643 = vst [vmem:[%s196 + $0x4e8] sm:$0xff] %v530
        %1644 = vst [vmem:[%s196 + $0x4f0] sm:$0xff] %v622
        %1645 = vst [vmem:[%s196 + $0x4f8] sm:$0xff] %v714
        %1646 = vst [vmem:[%s196 + $0x500] sm:$0xff] %v806
        %1647 = vst [vmem:[%s196 + $0x508] sm:$0xff] %v898
        %1648 = vst [vmem:[%s196 + $0x510] sm:$0xff] %v990
        %1649 = vst [vmem:[%s196 + $0x518] sm:$0xff] %v1082
        %1650 = vst [vmem:[%s196 + $0x520] sm:$0xff] %v1174
        %1651 = vst [vmem:[%s196 + $0x528] sm:$0xff] %v1266
        %1652 = vst [vmem:[%s196 + $0x530] sm:$0xff] %v1358
        %1653 = vst.msk [vmem:[%s196 + $0x538] sm:$0xff] %vm1496, %v1450
        %1654 = vst [vmem:[%s196 + $0x540] sm:$0xff] %v441
        %1655 = vst [vmem:[%s196 + $0x548] sm:$0xff] %v533
        %1656 = vst [vmem:[%s196 + $0x550] sm:$0xff] %v625
        %1657 = vst [vmem:[%s196 + $0x558] sm:$0xff] %v717
        %1658 = vst [vmem:[%s196 + $0x560] sm:$0xff] %v809
        %1659 = vst [vmem:[%s196 + $0x568] sm:$0xff] %v901
        %1660 = vst [vmem:[%s196 + $0x570] sm:$0xff] %v993
        %1661 = vst [vmem:[%s196 + $0x578] sm:$0xff] %v1085
        %1662 = vst [vmem:[%s196 + $0x580] sm:$0xff] %v1177
        %1663 = vst [vmem:[%s196 + $0x588] sm:$0xff] %v1269
        %1664 = vst [vmem:[%s196 + $0x590] sm:$0xff] %v1361
        %1665 = vst.msk [vmem:[%s196 + $0x598] sm:$0xff] %vm1496, %v1453
        %1666 = vst [vmem:[%s196 + $0x5a0] sm:$0xff] %v444
        %1667 = vst [vmem:[%s196 + $0x5a8] sm:$0xff] %v536
        %1668 = vst [vmem:[%s196 + $0x5b0] sm:$0xff] %v628
        %1669 = vst [vmem:[%s196 + $0x5b8] sm:$0xff] %v720
        %1670 = vst [vmem:[%s196 + $0x5c0] sm:$0xff] %v812
        %1671 = vst [vmem:[%s196 + $0x5c8] sm:$0xff] %v904
        %1672 = vst [vmem:[%s196 + $0x5d0] sm:$0xff] %v996
        %1673 = vst [vmem:[%s196 + $0x5d8] sm:$0xff] %v1088
        %1674 = vst [vmem:[%s196 + $0x5e0] sm:$0xff] %v1180
        %1675 = vst [vmem:[%s196 + $0x5e8] sm:$0xff] %v1272
        %1676 = vst [vmem:[%s196 + $0x5f0] sm:$0xff] %v1364
        %1677 = vst.msk [vmem:[%s196 + $0x5f8] sm:$0xff] %vm1496, %v1456
        %1678 = vst [vmem:[%s196 + $0x600] sm:$0xff] %v447
        %1679 = vst [vmem:[%s196 + $0x608] sm:$0xff] %v539
        %1680 = vst [vmem:[%s196 + $0x610] sm:$0xff] %v631
        %1681 = vst [vmem:[%s196 + $0x618] sm:$0xff] %v723
        %1682 = vst [vmem:[%s196 + $0x620] sm:$0xff] %v815
        %1683 = vst [vmem:[%s196 + $0x628] sm:$0xff] %v907
        %1684 = vst [vmem:[%s196 + $0x630] sm:$0xff] %v999
        %1685 = vst [vmem:[%s196 + $0x638] sm:$0xff] %v1091
        %1686 = vst [vmem:[%s196 + $0x640] sm:$0xff] %v1183
        %1687 = vst [vmem:[%s196 + $0x648] sm:$0xff] %v1275
        %1688 = vst [vmem:[%s196 + $0x650] sm:$0xff] %v1367
        %1689 = vst.msk [vmem:[%s196 + $0x658] sm:$0xff] %vm1496, %v1459
        %1690 = vst [vmem:[%s196 + $0x660] sm:$0xff] %v450
        %1691 = vst [vmem:[%s196 + $0x668] sm:$0xff] %v542
        %1692 = vst [vmem:[%s196 + $0x670] sm:$0xff] %v634
        %1693 = vst [vmem:[%s196 + $0x678] sm:$0xff] %v726
        %1694 = vst [vmem:[%s196 + $0x680] sm:$0xff] %v818
        %1695 = vst [vmem:[%s196 + $0x688] sm:$0xff] %v910
        %1696 = vst [vmem:[%s196 + $0x690] sm:$0xff] %v1002
        %1697 = vst [vmem:[%s196 + $0x698] sm:$0xff] %v1094
        %1698 = vst [vmem:[%s196 + $0x6a0] sm:$0xff] %v1186
        %1699 = vst [vmem:[%s196 + $0x6a8] sm:$0xff] %v1278
        %1700 = vst [vmem:[%s196 + $0x6b0] sm:$0xff] %v1370
        %1701 = vst.msk [vmem:[%s196 + $0x6b8] sm:$0xff] %vm1496, %v1462
        %1702 = vst [vmem:[%s196 + $0x6c0] sm:$0xff] %v453
        %1703 = vst [vmem:[%s196 + $0x6c8] sm:$0xff] %v545
        %1704 = vst [vmem:[%s196 + $0x6d0] sm:$0xff] %v637
        %1705 = vst [vmem:[%s196 + $0x6d8] sm:$0xff] %v729
        %1706 = vst [vmem:[%s196 + $0x6e0] sm:$0xff] %v821
        %1707 = vst [vmem:[%s196 + $0x6e8] sm:$0xff] %v913
        %1708 = vst [vmem:[%s196 + $0x6f0] sm:$0xff] %v1005
        %1709 = vst [vmem:[%s196 + $0x6f8] sm:$0xff] %v1097
        %1710 = vst [vmem:[%s196 + $0x700] sm:$0xff] %v1189
        %1711 = vst [vmem:[%s196 + $0x708] sm:$0xff] %v1281
        %1712 = vst [vmem:[%s196 + $0x710] sm:$0xff] %v1373
        %1713 = vst.msk [vmem:[%s196 + $0x718] sm:$0xff] %vm1496, %v1465
        %1714 = vst [vmem:[%s196 + $0x720] sm:$0xff] %v456
        %1715 = vst [vmem:[%s196 + $0x728] sm:$0xff] %v548
        %1716 = vst [vmem:[%s196 + $0x730] sm:$0xff] %v640
        %1717 = vst [vmem:[%s196 + $0x738] sm:$0xff] %v732
        %1718 = vst [vmem:[%s196 + $0x740] sm:$0xff] %v824
        %1719 = vst [vmem:[%s196 + $0x748] sm:$0xff] %v916
        %1720 = vst [vmem:[%s196 + $0x750] sm:$0xff] %v1008
        %1721 = vst [vmem:[%s196 + $0x758] sm:$0xff] %v1100
        %1722 = vst [vmem:[%s196 + $0x760] sm:$0xff] %v1192
        %1723 = vst [vmem:[%s196 + $0x768] sm:$0xff] %v1284
        %1724 = vst [vmem:[%s196 + $0x770] sm:$0xff] %v1376
        %1725 = vst.msk [vmem:[%s196 + $0x778] sm:$0xff] %vm1496, %v1468
        %1726 = vst [vmem:[%s196 + $0x780] sm:$0xff] %v459
        %1727 = vst [vmem:[%s196 + $0x788] sm:$0xff] %v551
        %1728 = vst [vmem:[%s196 + $0x790] sm:$0xff] %v643
        %1729 = vst [vmem:[%s196 + $0x798] sm:$0xff] %v735
        %1730 = vst [vmem:[%s196 + $0x7a0] sm:$0xff] %v827
        %1731 = vst [vmem:[%s196 + $0x7a8] sm:$0xff] %v919
        %1732 = vst [vmem:[%s196 + $0x7b0] sm:$0xff] %v1011
        %1733 = vst [vmem:[%s196 + $0x7b8] sm:$0xff] %v1103
        %1734 = vst [vmem:[%s196 + $0x7c0] sm:$0xff] %v1195
        %1735 = vst [vmem:[%s196 + $0x7c8] sm:$0xff] %v1287
        %1736 = vst [vmem:[%s196 + $0x7d0] sm:$0xff] %v1379
        %1737 = vst.msk [vmem:[%s196 + $0x7d8] sm:$0xff] %vm1496, %v1471
        %1738 = vst [vmem:[%s196 + $0x7e0] sm:$0xff] %v462
        %1739 = vst [vmem:[%s196 + $0x7e8] sm:$0xff] %v554
        %1740 = vst [vmem:[%s196 + $0x7f0] sm:$0xff] %v646
        %1741 = vst [vmem:[%s196 + $0x7f8] sm:$0xff] %v738
        %1742 = vst [vmem:[%s196 + $0x800] sm:$0xff] %v830
        %1743 = vst [vmem:[%s196 + $0x808] sm:$0xff] %v922
        %1744 = vst [vmem:[%s196 + $0x810] sm:$0xff] %v1014
        %1745 = vst [vmem:[%s196 + $0x818] sm:$0xff] %v1106
        %1746 = vst [vmem:[%s196 + $0x820] sm:$0xff] %v1198
        %1747 = vst [vmem:[%s196 + $0x828] sm:$0xff] %v1290
        %1748 = vst [vmem:[%s196 + $0x830] sm:$0xff] %v1382
        %1749 = vst.msk [vmem:[%s196 + $0x838] sm:$0xff] %vm1496, %v1474
        %1750 = vst [vmem:[%s196 + $0x840] sm:$0xff] %v465
        %1751 = vst [vmem:[%s196 + $0x848] sm:$0xff] %v557
        %1752 = vst [vmem:[%s196 + $0x850] sm:$0xff] %v649
        %1753 = vst [vmem:[%s196 + $0x858] sm:$0xff] %v741
        %1754 = vst [vmem:[%s196 + $0x860] sm:$0xff] %v833
        %1755 = vst [vmem:[%s196 + $0x868] sm:$0xff] %v925
        %1756 = vst [vmem:[%s196 + $0x870] sm:$0xff] %v1017
        %1757 = vst [vmem:[%s196 + $0x878] sm:$0xff] %v1109
        %1758 = vst [vmem:[%s196 + $0x880] sm:$0xff] %v1201
        %1759 = vst [vmem:[%s196 + $0x888] sm:$0xff] %v1293
        %1760 = vst [vmem:[%s196 + $0x890] sm:$0xff] %v1385
        %1761 = vst.msk [vmem:[%s196 + $0x898] sm:$0xff] %vm1496, %v1477
        %1762 = vst [vmem:[%s196 + $0x8a0] sm:$0xff] %v468
        %1763 = vst [vmem:[%s196 + $0x8a8] sm:$0xff] %v560
        %1764 = vst [vmem:[%s196 + $0x8b0] sm:$0xff] %v652
        %1765 = vst [vmem:[%s196 + $0x8b8] sm:$0xff] %v744
        %1766 = vst [vmem:[%s196 + $0x8c0] sm:$0xff] %v836
        %1767 = vst [vmem:[%s196 + $0x8c8] sm:$0xff] %v928
        %1768 = vst [vmem:[%s196 + $0x8d0] sm:$0xff] %v1020
        %1769 = vst [vmem:[%s196 + $0x8d8] sm:$0xff] %v1112
        %1770 = vst [vmem:[%s196 + $0x8e0] sm:$0xff] %v1204
        %1771 = vst [vmem:[%s196 + $0x8e8] sm:$0xff] %v1296
        %1772 = vst [vmem:[%s196 + $0x8f0] sm:$0xff] %v1388
        %1773 = vst.msk [vmem:[%s196 + $0x8f8] sm:$0xff] %vm1496, %v1480
        %1774 = vst [vmem:[%s196 + $0x900] sm:$0xff] %v471
        %1775 = vst [vmem:[%s196 + $0x908] sm:$0xff] %v563
        %1776 = vst [vmem:[%s196 + $0x910] sm:$0xff] %v655
        %1777 = vst [vmem:[%s196 + $0x918] sm:$0xff] %v747
        %1778 = vst [vmem:[%s196 + $0x920] sm:$0xff] %v839
        %1779 = vst [vmem:[%s196 + $0x928] sm:$0xff] %v931
        %1780 = vst [vmem:[%s196 + $0x930] sm:$0xff] %v1023
        %1781 = vst [vmem:[%s196 + $0x938] sm:$0xff] %v1115
        %1782 = vst [vmem:[%s196 + $0x940] sm:$0xff] %v1207
        %1783 = vst [vmem:[%s196 + $0x948] sm:$0xff] %v1299
        %1784 = vst [vmem:[%s196 + $0x950] sm:$0xff] %v1391
        %1785 = vst.msk [vmem:[%s196 + $0x958] sm:$0xff] %vm1496, %v1483
        %s1786 = sand.u32 %s95, 1
        %s1787 = scalar_lea.sflag [#allocation4], %s1786
        %s1788 = sand.u32 %s95, 1
        %s1789 = smul.addr %s1788, 2400
        %s1790 = scalar_lea.vmem [#allocation7], %s1789
        // Predicated region
        $region41: #{lipsync3d_mesh_forward.1} parent=31 // pred_check
          %p1791 = pneg %p105
        $region42: #{lipsync3d_mesh_forward.1} parent=31 // pred_check_branch
          %1793 = sbr.rel (%p1791) target = $region44
        $region43: #{lipsync3d_mesh_forward.1} parent=31 // pred_region
          %s1794 = smul.u32 25, %s19
          %1796 = vsyncadd %s1787, 0
          %s1797 = smul.addr %s1794, 12
          %s1798 = smul.addr %s1797, 8
          %s1799 = scalar_lea.hbm %s3, %s1798
          %s1800 = sshll.u32 %s1790, 4
          %s1801 = int_to_ptr.vmem [resolvable:$true] %s1800
          %s1802 = sshll.u32 %s1799, 4
          %s1803 = int_to_ptr.hbm [resolvable:$true] %s1802
          %1808 = dma.vmem_to_hbm [thread:$0]  %s1801, 38400, %s1803, %s1787, 1536, 1536, 96
        $region44: #{lipsync3d_mesh_forward.1} parent=31 // pred_fallthru
          _
      $region32: #{lipsync3d_mesh_forward.1} parent=5 // pred_fallthru
        _
      %p1809 = scmp.le.s32.totalorder 2, %s14
      // Predicated region
      $region45: #{lipsync3d_mesh_forward.1} parent=5 // pred_check
        %p1810 = pneg %p1809
      $region46: #{lipsync3d_mesh_forward.1} parent=5 // pred_check_branch
        %1812 = sbr.rel (%p1810) target = $region48
      $region47: #{lipsync3d_mesh_forward.1} parent=5 // pred_region
        %s1813 = ssub.s32 %s14, 2
        // Predicated region
        $region49: #{lipsync3d_mesh_forward.1} parent=47 // pred_check
          %p1814 = pneg %p111
        $region50: #{lipsync3d_mesh_forward.1} parent=47 // pred_check_branch
          %1816 = sbr.rel (%p1814) target = $region52
        $region51: #{lipsync3d_mesh_forward.1} parent=47 // pred_region
          %s1817 = sand.u32 %s96, 1
          %s1818 = scalar_lea.sflag [#allocation4], %s1817
          %s1819 = sand.u32 %s96, 1
          %s1820 = smul.addr %s1819, 2400
          %s1821 = scalar_lea.vmem [#allocation7], %s1820
          %1823 = dma.done %s1818, 38400
        $region52: #{lipsync3d_mesh_forward.1} parent=47 // pred_fallthru
          _
      $region48: #{lipsync3d_mesh_forward.1} parent=5 // pred_fallthru
        _
    $region6: #{lipsync3d_mesh_forward.1} parent=1 // loop_footer
      %s18 = sadd.s32 1, %s14
    $region7: #{lipsync3d_mesh_forward.1} parent=1 // loop_footer_branch
      %13 = sbr.rel target = $region3
    $region8: #{lipsync3d_mesh_forward.1} parent=1 // loop_exit
      _
    %1824 = vsyncpa [#allocation3], 1
    %s1825 = scalar_lea.sflag [#allocation3], 1
    %1826 = vsyncpa %s1825, 1
    %1827 = vsyncpa [#allocation6], 1
    %1828 = vsyncpa [#allocation4], 1
    %s1829 = scalar_lea.sflag [#allocation4], 1
    %1830 = vsyncpa %s1829, 1

</llo_original>
